<compile_context>
chip_gen: v5e
topology: v5e:2x2
jax: 0.10.0
libtpu: 0.0.40
codegen_flags: <defaults>
</compile_context>

<pallas_src>
import jax
import jax.numpy as jnp
from jax.experimental import pallas as pl
from jax.experimental.pallas import tpu as pltpu

EPS = 1e-5                                   # nn.BatchNorm1d default eps

CHANNELS_NOISE = 92
CLASSES = 10
IN_DIM = CHANNELS_NOISE + CLASSES            # 102, matches nn.Linear(102, 256)
EMB_PAD = 16                                 # one-hot / emb_w rows padded 10 -> 16
H1, H2, H3, OUT_DIM = 256, 512, 512, 64
OUT_PAD = 128                                # lane-dense output slab
MAX_TILE_B = 256                             # batch rows per grid step


def _round_up(n, m):
    return (n + m - 1) // m * m


def generator_mlp_kernel(labels_ref, x_ref, emb_w_ref, w1x_ref, b1_ref,
                         w2_ref, b2_ref, w3_ref, b3_ref, w4_ref, b4_ref,
                         out_ref):
    """One batch tile of the fused Generator MLP.

    BatchNorm batch statistics are already folded into emb_w / w1x / b1 by the
    XLA prologue, so per-tile work is: one-hot gather matmul + 4 MXU matmuls
    + bias/ReLU/tanh.
    """
    tb = labels_ref.shape[0]

    # nn.Embedding gather as a one-hot matmul, fused with BN + Linear split:
    #   h1 = onehot @ emb_w + x @ w1x_s + b1_eff
    labs = labels_ref[...]                                        # (TB, 1) i32
    onehot = (labs == jax.lax.broadcasted_iota(jnp.int32, (tb, EMB_PAD), 1)
              ).astype(jnp.bfloat16)                              # (TB, 16)

    h = (jnp.dot(onehot, emb_w_ref[...], preferred_element_type=jnp.float32)
         + jnp.dot(x_ref[...], w1x_ref[...],
                   preferred_element_type=jnp.float32)
         + b1_ref[...])                                           # (TB, 256) f32
    h = jnp.maximum(h, 0.0).astype(jnp.bfloat16)                  # ReLU -> bf16

    h = jnp.dot(h, w2_ref[...], preferred_element_type=jnp.float32) + b2_ref[...]
    h = jnp.maximum(h, 0.0).astype(jnp.bfloat16)

    h = jnp.dot(h, w3_ref[...], preferred_element_type=jnp.float32) + b3_ref[...]
    h = jnp.maximum(h, 0.0).astype(jnp.bfloat16)

    h = jnp.dot(h, w4_ref[...], preferred_element_type=jnp.float32) + b4_ref[...]
    out_ref[...] = jnp.tanh(h)                                    # (TB, 128) f32


def init_params(key):
    """Deterministic parameters matching the shapes of Generator.__init__.

    Linear weights are stored transposed to (in, out) so the kernel computes
    y = x @ W + b (PyTorch stores (out, in) and does x @ W.T + b).
    """
    ks = jax.random.split(key, 6)
    return {
        "emb": jax.random.normal(ks[0], (CLASSES, CLASSES), jnp.float32),
        # BatchNorm1d(102) affine params (PyTorch defaults: gamma=1, beta=0)
        "gamma": jnp.ones((1, IN_DIM), jnp.float32),
        "beta": jnp.zeros((1, IN_DIM), jnp.float32),
        "w1": 0.05 * jax.random.normal(ks[1], (IN_DIM, H1), jnp.float32),
        "b1": 0.01 * jnp.ones((1, H1), jnp.float32),
        "w2": 0.05 * jax.random.normal(ks[2], (H1, H2), jnp.float32),
        "b2": 0.01 * jnp.ones((1, H2), jnp.float32),
        "w3": 0.05 * jax.random.normal(ks[3], (H2, H3), jnp.float32),
        "b3": 0.01 * jnp.ones((1, H3), jnp.float32),
        "w4": 0.05 * jax.random.normal(ks[4], (H3, OUT_DIM), jnp.float32),
        "b4": 0.01 * jnp.ones((1, OUT_DIM), jnp.float32),
    }


def prepare_params(params):
    """One-time prep: fold BN affine (gamma/beta) into layer 1, split W1 over
    the concat halves, pad layer 4 to 128 output lanes, cast static weights
    to bf16.  The per-call batch-stat folding happens in generator_forward."""
    gamma, beta = params["gamma"], params["beta"]
    w1_g = params["w1"] * gamma.T                       # diag(gamma) @ W1
    b1 = params["b1"] + beta @ params["w1"]             # beta @ W1 + b1
    w4 = jnp.pad(params["w4"], ((0, 0), (0, OUT_PAD - OUT_DIM)))
    b4 = jnp.pad(params["b4"], ((0, 0), (0, OUT_PAD - OUT_DIM)))
    return {
        "emb": params["emb"],                           # (10, 10) f32
        "w1e_g": w1_g[:CLASSES],                        # (10, 256) f32 (per-call fold)
        "w1x_g": w1_g[CLASSES:],                        # (92, 256) f32 (per-call fold)
        "b1": b1.astype(jnp.float32),
        "w2": params["w2"].astype(jnp.bfloat16), "b2": params["b2"],
        "w3": params["w3"].astype(jnp.bfloat16), "b3": params["b3"],
        "w4": w4.astype(jnp.bfloat16), "b4": b4.astype(jnp.float32),
    }


@jax.jit
def generator_forward(prepped, x, labels):
    """Equivalent of Generator.forward(x, labels)."""
    B = x.shape[0]
    x2 = x.reshape(B, -1).astype(jnp.float32)            # x.view(B, -1)
    labels1 = labels.reshape(B).astype(jnp.int32)

    # ---- BatchNorm1d(102) training-mode batch stats, hoisted to XLA --------
    # Embedding half from label counts: mu = (counts/B) @ emb, biased var via
    # E[e^2] - mu^2.  Fold the whole normalize + Linear row block into emb_w.
    emb = prepped["emb"]
    counts = jnp.sum(
        (labels1[:, None] == jnp.arange(CLASSES, dtype=jnp.int32)[None, :]
         ).astype(jnp.float32), axis=0)                  # (10,)
    p = counts / B
    mu_e = p @ emb
    var_e = jnp.maximum(p @ (emb * emb) - mu_e * mu_e, 0.0)
    inv_se = jax.lax.rsqrt(var_e + EPS)
    emb_eff = (emb - mu_e[None, :]) * inv_se[None, :]    # (10, 10)
    emb_w = jnp.pad(emb_eff @ prepped["w1e_g"],
                    ((0, EMB_PAD - CLASSES), (0, 0))).astype(jnp.bfloat16)

    # Noise half: single-pass stats, then fold the normalize into w1x / b1.
    mu_x = jnp.mean(x2, axis=0)
    var_x = jnp.maximum(jnp.mean(x2 * x2, axis=0) - mu_x * mu_x, 0.0)
    inv_sx = jax.lax.rsqrt(var_x + EPS)
    w1x_s = (prepped["w1x_g"] * inv_sx[:, None]).astype(jnp.bfloat16)
    b1_eff = prepped["b1"] - (mu_x * inv_sx)[None, :] @ prepped["w1x_g"]

    # ---- batch tiling: pad B to a multiple of the tile (>=16, <=256) -------
    tb = min(MAX_TILE_B, _round_up(B, 16))
    b_pad = _round_up(B, tb)
    x_b = jnp.pad(x2, ((0, b_pad - B), (0, 0))).astype(jnp.bfloat16)
    lab_b = jnp.pad(labels1, (0, b_pad - B)).reshape(b_pad, 1)

    # Advisory cost hint (weight-DMA dominated at small B).
    weight_bytes = 2 * (EMB_PAD * H1 + CHANNELS_NOISE * H1
                        + H1 * H2 + H2 * H3 + H3 * OUT_PAD)
    io_bytes = (4 * (H1 + H2 + H3 + OUT_PAD)                 # biases
                + 2 * b_pad * CHANNELS_NOISE + 4 * b_pad     # x (bf16) + labels
                + 4 * b_pad * OUT_PAD)                       # output
    cost = pl.CostEstimate(
        flops=2 * b_pad * (EMB_PAD * H1 + CHANNELS_NOISE * H1
                           + H1 * H2 + H2 * H3 + H3 * OUT_PAD),
        transcendentals=b_pad * OUT_PAD,                     # tanh
        bytes_accessed=weight_bytes + io_bytes,
    )

    def pinned(shape):
        return pl.BlockSpec(shape, lambda i: (0, 0))

    out = pl.pallas_call(
        generator_mlp_kernel,
        out_shape=jax.ShapeDtypeStruct((b_pad, OUT_PAD), jnp.float32),
        grid=(b_pad // tb,),
        in_specs=[
            pl.BlockSpec((tb, 1), lambda i: (i, 0)),              # labels
            pl.BlockSpec((tb, CHANNELS_NOISE), lambda i: (i, 0)),  # x (bf16)
            pinned((EMB_PAD, H1)),                                # emb_w
            pinned((CHANNELS_NOISE, H1)),                         # w1x_s
            pinned((1, H1)),                                      # b1_eff
            pinned((H1, H2)), pinned((1, H2)),                    # w2, b2
            pinned((H2, H3)), pinned((1, H3)),                    # w3, b3
            pinned((H3, OUT_PAD)), pinned((1, OUT_PAD)),          # w4, b4
        ],
        out_specs=pl.BlockSpec((tb, OUT_PAD), lambda i: (i, 0)),
        compiler_params=pltpu.CompilerParams(
            dimension_semantics=("parallel",),
            vmem_limit_bytes=32 * 1024 * 1024),
        cost_estimate=cost,
    )(lab_b, x_b, emb_w, w1x_s, b1_eff,
      prepped["w2"], prepped["b2"], prepped["w3"], prepped["b3"],
      prepped["w4"], prepped["b4"])

    # trained = train.view(B, 1, 8, 8)  (drop batch padding + lane padding)
    return out[:B, :OUT_DIM].reshape(B, 1, 8, 8)


if __name__ == "__main__":
    key = jax.random.PRNGKey(0)
    k_params, k_x, k_lab = jax.random.split(key, 3)

    params = init_params(k_params)
    prepped = prepare_params(params)

    B = 2
    x = jax.random.normal(k_x, (B, CHANNELS_NOISE), jnp.float32)   # noise vector
    labels = jax.random.randint(k_lab, (B,), 0, CLASSES, jnp.int32)

    out = generator_forward(prepped, x, labels)
    out = jax.block_until_ready(out)

    assert out.shape == (B, 1, 8, 8), out.shape
    assert out.dtype == jnp.float32
    assert bool(jnp.all(jnp.isfinite(out)))
    print("KERNEL_OK")
</pallas_src>

<mosaic_0001>
module attributes {stable_mosaic.version = 11 : i64} {
  func.func @generator_mlp_kernel(%arg0: i32, %arg1: memref<16x1xi32, #tpu.memory_space<vmem>>, %arg2: memref<16x92xbf16, #tpu.memory_space<vmem>>, %arg3: memref<16x256xbf16, #tpu.memory_space<vmem>>, %arg4: memref<92x256xbf16, #tpu.memory_space<vmem>>, %arg5: memref<1x256xf32, #tpu.memory_space<vmem>>, %arg6: memref<256x512xbf16, #tpu.memory_space<vmem>>, %arg7: memref<1x512xf32, #tpu.memory_space<vmem>>, %arg8: memref<512x512xbf16, #tpu.memory_space<vmem>>, %arg9: memref<1x512xf32, #tpu.memory_space<vmem>>, %arg10: memref<512x128xbf16, #tpu.memory_space<vmem>>, %arg11: memref<1x128xf32, #tpu.memory_space<vmem>>, %arg12: memref<16x128xf32, #tpu.memory_space<vmem>>) attributes {dimension_semantics = [#tpu.dimension_semantics<parallel>], iteration_bounds = array<i64: 1>, scalar_prefetch = 0 : i64, scratch_operands = 0 : i64, tpu.core_type = #tpu.core_type<tc>, window_params = [{transform_indices = @transform_0, window_bounds = array<i64: 16, 1>}, {transform_indices = @transform_1, window_bounds = array<i64: 16, 92>}, {pipeline_mode = #tpu.pipeline_mode<synchronous>, transform_indices = @transform_2, window_bounds = array<i64: 16, 256>}, {pipeline_mode = #tpu.pipeline_mode<synchronous>, transform_indices = @transform_3, window_bounds = array<i64: 92, 256>}, {pipeline_mode = #tpu.pipeline_mode<synchronous>, transform_indices = @transform_4, window_bounds = array<i64: 1, 256>}, {pipeline_mode = #tpu.pipeline_mode<synchronous>, transform_indices = @transform_5, window_bounds = array<i64: 256, 512>}, {pipeline_mode = #tpu.pipeline_mode<synchronous>, transform_indices = @transform_6, window_bounds = array<i64: 1, 512>}, {pipeline_mode = #tpu.pipeline_mode<synchronous>, transform_indices = @transform_7, window_bounds = array<i64: 512, 512>}, {pipeline_mode = #tpu.pipeline_mode<synchronous>, transform_indices = @transform_8, window_bounds = array<i64: 1, 512>}, {pipeline_mode = #tpu.pipeline_mode<synchronous>, transform_indices = @transform_9, window_bounds = array<i64: 512, 128>}, {pipeline_mode = #tpu.pipeline_mode<synchronous>, transform_indices = @transform_10, window_bounds = array<i64: 1, 128>}, {transform_indices = @transform_11, window_bounds = array<i64: 16, 128>}]} {
    %c0 = arith.constant 0 : index
    %c0_0 = arith.constant 0 : index
    %0 = vector.load %arg1[%c0, %c0_0] : memref<16x1xi32, #tpu.memory_space<vmem>>, vector<16x1xi32>
    %1 = tpu.iota {dimensions = array<i32: 1>} : vector<16x16xi32>
    %2 = vector.broadcast %0 : vector<16x1xi32> to vector<16x16xi32>
    %3 = arith.cmpi eq, %2, %1 : vector<16x16xi32>
    %4 = arith.extui %3 : vector<16x16xi1> to vector<16x16xi32>
    %5 = arith.sitofp %4 : vector<16x16xi32> to vector<16x16xf32>
    %6 = arith.truncf %5 : vector<16x16xf32> to vector<16x16xbf16>
    %c0_1 = arith.constant 0 : index
    %c0_2 = arith.constant 0 : index
    %7 = vector.load %arg3[%c0_1, %c0_2] : memref<16x256xbf16, #tpu.memory_space<vmem>>, vector<16x256xbf16>
    %cst = arith.constant dense<0.000000e+00> : vector<16x256xf32>
    %8 = tpu.matmul %6, %7, %cst {dimension_numbers = #tpu.dot_dimension_numbers<[1], [0], [0], [1], [0, 0, 1, 1], [], []>} : vector<16x16xbf16>, vector<16x256xbf16>, vector<16x256xf32> -> vector<16x256xf32>
    %c0_3 = arith.constant 0 : index
    %c0_4 = arith.constant 0 : index
    %9 = vector.load %arg2[%c0_3, %c0_4] : memref<16x92xbf16, #tpu.memory_space<vmem>>, vector<16x92xbf16>
    %c0_5 = arith.constant 0 : index
    %c0_6 = arith.constant 0 : index
    %10 = vector.load %arg4[%c0_5, %c0_6] : memref<92x256xbf16, #tpu.memory_space<vmem>>, vector<92x256xbf16>
    %cst_7 = arith.constant dense<0.000000e+00> : vector<16x256xf32>
    %11 = tpu.matmul %9, %10, %cst_7 {dimension_numbers = #tpu.dot_dimension_numbers<[1], [0], [0], [1], [0, 0, 1, 1], [], []>} : vector<16x92xbf16>, vector<92x256xbf16>, vector<16x256xf32> -> vector<16x256xf32>
    %12 = arith.addf %8, %11 : vector<16x256xf32>
    %c0_8 = arith.constant 0 : index
    %c0_9 = arith.constant 0 : index
    %13 = vector.load %arg5[%c0_8, %c0_9] : memref<1x256xf32, #tpu.memory_space<vmem>>, vector<1x256xf32>
    %14 = vector.broadcast %13 : vector<1x256xf32> to vector<16x256xf32>
    %15 = arith.addf %12, %14 : vector<16x256xf32>
    %cst_10 = arith.constant 0.000000e+00 : f32
    %16 = vector.broadcast %cst_10 : f32 to vector<16x256xf32>
    %17 = arith.maximumf %15, %16 : vector<16x256xf32>
    %18 = arith.truncf %17 : vector<16x256xf32> to vector<16x256xbf16>
    %c0_11 = arith.constant 0 : index
    %c0_12 = arith.constant 0 : index
    %19 = vector.load %arg6[%c0_11, %c0_12] : memref<256x512xbf16, #tpu.memory_space<vmem>>, vector<256x512xbf16>
    %cst_13 = arith.constant dense<0.000000e+00> : vector<16x512xf32>
    %20 = tpu.matmul %18, %19, %cst_13 {dimension_numbers = #tpu.dot_dimension_numbers<[1], [0], [0], [1], [0, 0, 1, 1], [], []>} : vector<16x256xbf16>, vector<256x512xbf16>, vector<16x512xf32> -> vector<16x512xf32>
    %c0_14 = arith.constant 0 : index
    %c0_15 = arith.constant 0 : index
    %21 = vector.load %arg7[%c0_14, %c0_15] : memref<1x512xf32, #tpu.memory_space<vmem>>, vector<1x512xf32>
    %22 = vector.broadcast %21 : vector<1x512xf32> to vector<16x512xf32>
    %23 = arith.addf %20, %22 : vector<16x512xf32>
    %cst_16 = arith.constant 0.000000e+00 : f32
    %24 = vector.broadcast %cst_16 : f32 to vector<16x512xf32>
    %25 = arith.maximumf %23, %24 : vector<16x512xf32>
    %26 = arith.truncf %25 : vector<16x512xf32> to vector<16x512xbf16>
    %c0_17 = arith.constant 0 : index
    %c0_18 = arith.constant 0 : index
    %27 = vector.load %arg8[%c0_17, %c0_18] : memref<512x512xbf16, #tpu.memory_space<vmem>>, vector<512x512xbf16>
    %cst_19 = arith.constant dense<0.000000e+00> : vector<16x512xf32>
    %28 = tpu.matmul %26, %27, %cst_19 {dimension_numbers = #tpu.dot_dimension_numbers<[1], [0], [0], [1], [0, 0, 1, 1], [], []>} : vector<16x512xbf16>, vector<512x512xbf16>, vector<16x512xf32> -> vector<16x512xf32>
    %c0_20 = arith.constant 0 : index
    %c0_21 = arith.constant 0 : index
    %29 = vector.load %arg9[%c0_20, %c0_21] : memref<1x512xf32, #tpu.memory_space<vmem>>, vector<1x512xf32>
    %30 = vector.broadcast %29 : vector<1x512xf32> to vector<16x512xf32>
    %31 = arith.addf %28, %30 : vector<16x512xf32>
    %cst_22 = arith.constant 0.000000e+00 : f32
    %32 = vector.broadcast %cst_22 : f32 to vector<16x512xf32>
    %33 = arith.maximumf %31, %32 : vector<16x512xf32>
    %34 = arith.truncf %33 : vector<16x512xf32> to vector<16x512xbf16>
    %c0_23 = arith.constant 0 : index
    %c0_24 = arith.constant 0 : index
    %35 = vector.load %arg10[%c0_23, %c0_24] : memref<512x128xbf16, #tpu.memory_space<vmem>>, vector<512x128xbf16>
    %cst_25 = arith.constant dense<0.000000e+00> : vector<16x128xf32>
    %36 = tpu.matmul %34, %35, %cst_25 {dimension_numbers = #tpu.dot_dimension_numbers<[1], [0], [0], [1], [0, 0, 1, 1], [], []>} : vector<16x512xbf16>, vector<512x128xbf16>, vector<16x128xf32> -> vector<16x128xf32>
    %c0_26 = arith.constant 0 : index
    %c0_27 = arith.constant 0 : index
    %37 = vector.load %arg11[%c0_26, %c0_27] : memref<1x128xf32, #tpu.memory_space<vmem>>, vector<1x128xf32>
    %38 = vector.broadcast %37 : vector<1x128xf32> to vector<16x128xf32>
    %39 = arith.addf %36, %38 : vector<16x128xf32>
    %40 = math.tanh %39 : vector<16x128xf32>
    %c0_28 = arith.constant 0 : index
    %c0_29 = arith.constant 0 : index
    %41 = vector.load %arg12[%c0_28, %c0_29] : memref<16x128xf32, #tpu.memory_space<vmem>>, vector<16x128xf32>
    tpu.vector_store %arg12[%c0_28, %c0_29], %40 {strides = array<i32>} : memref<16x128xf32, #tpu.memory_space<vmem>>, vector<16x128xf32>,
    return
  }
  func.func @transform_0(%arg0: i32) -> (i32, i32) {
    %c0_i32 = arith.constant 0 : i32
    %c0_i32_0 = arith.constant 0 : i32
    return %arg0, %c0_i32 : i32, i32
  }
  func.func @transform_1(%arg0: i32) -> (i32, i32) {
    %c0_i32 = arith.constant 0 : i32
    %c0_i32_0 = arith.constant 0 : i32
    return %arg0, %c0_i32 : i32, i32
  }
  func.func @transform_2(%arg0: i32) -> (i32, i32) {
    %c0_i32 = arith.constant 0 : i32
    %c0_i32_0 = arith.constant 0 : i32
    %c0_i32_1 = arith.constant 0 : i32
    return %c0_i32, %c0_i32_0 : i32, i32
  }
  func.func @transform_3(%arg0: i32) -> (i32, i32) {
    %c0_i32 = arith.constant 0 : i32
    %c0_i32_0 = arith.constant 0 : i32
    %c0_i32_1 = arith.constant 0 : i32
    return %c0_i32, %c0_i32_0 : i32, i32
  }
  func.func @transform_4(%arg0: i32) -> (i32, i32) {
    %c0_i32 = arith.constant 0 : i32
    %c0_i32_0 = arith.constant 0 : i32
    %c0_i32_1 = arith.constant 0 : i32
    return %c0_i32, %c0_i32_0 : i32, i32
  }
  func.func @transform_5(%arg0: i32) -> (i32, i32) {
    %c0_i32 = arith.constant 0 : i32
    %c0_i32_0 = arith.constant 0 : i32
    %c0_i32_1 = arith.constant 0 : i32
    return %c0_i32, %c0_i32_0 : i32, i32
  }
  func.func @transform_6(%arg0: i32) -> (i32, i32) {
    %c0_i32 = arith.constant 0 : i32
    %c0_i32_0 = arith.constant 0 : i32
    %c0_i32_1 = arith.constant 0 : i32
    return %c0_i32, %c0_i32_0 : i32, i32
  }
  func.func @transform_7(%arg0: i32) -> (i32, i32) {
    %c0_i32 = arith.constant 0 : i32
    %c0_i32_0 = arith.constant 0 : i32
    %c0_i32_1 = arith.constant 0 : i32
    return %c0_i32, %c0_i32_0 : i32, i32
  }
  func.func @transform_8(%arg0: i32) -> (i32, i32) {
    %c0_i32 = arith.constant 0 : i32
    %c0_i32_0 = arith.constant 0 : i32
    %c0_i32_1 = arith.constant 0 : i32
    return %c0_i32, %c0_i32_0 : i32, i32
  }
  func.func @transform_9(%arg0: i32) -> (i32, i32) {
    %c0_i32 = arith.constant 0 : i32
    %c0_i32_0 = arith.constant 0 : i32
    %c0_i32_1 = arith.constant 0 : i32
    return %c0_i32, %c0_i32_0 : i32, i32
  }
  func.func @transform_10(%arg0: i32) -> (i32, i32) {
    %c0_i32 = arith.constant 0 : i32
    %c0_i32_0 = arith.constant 0 : i32
    %c0_i32_1 = arith.constant 0 : i32
    return %c0_i32, %c0_i32_0 : i32, i32
  }
  func.func @transform_11(%arg0: i32) -> (i32, i32) {
    %c0_i32 = arith.constant 0 : i32
    %c0_i32_0 = arith.constant 0 : i32
    return %arg0, %c0_i32 : i32, i32
  }
}

</mosaic_0001>

<llo_original>
// kernel: sub.13
$region0: #{sub.13}
  #allocation0 [shape = 's32[1]{0}', space=sflag, size = 0x4, scoped, tag = 'scoped memory for sub.13']
  %s0 = inlined_call_operand.vmem [shape: f32[1,256], index: 0, kind: input, shape index: {}]
  %s1 = inlined_call_operand.vmem [shape: f32[1,256], index: 1, kind: input, shape index: {}]
  %s2 = inlined_call_operand.vmem [shape: f32[1,256], index: 2, kind: output, shape index: {}]
  %v3 = vld [vmem:[%s0] sm:$0x1]
  %v4 = vld [vmem:[%s1] sm:$0x1]
  %5 = xla_tuple %v3, %v4
  %6 = xla_tuple %5
  %v7 = vsub.f32 %v3, %v4
  %8 = xla_tuple %v7
  %9 = vst [vmem:[%s2] sm:$0x1] %v7
  %s10 = scalar_lea.vmem %s0, 1
  %v11 = vld [vmem:[%s10] sm:$0x1]
  %s12 = scalar_lea.vmem %s1, 1
  %v13 = vld [vmem:[%s12] sm:$0x1]
  %14 = xla_tuple %v11, %v13
  %15 = xla_tuple %14
  %v16 = vsub.f32 %v11, %v13
  %17 = xla_tuple %v16
  %s18 = scalar_lea.vmem %s2, 1
  %19 = vst [vmem:[%s18] sm:$0x1] %v16

// kernel: generator_forward.1
$region0: #{generator_forward.1}
  #allocation0 [shape = 'u32[]', space=smem, size = 0x4, offset = 0x4, fixed_abs, tag = 'smem constant byte address 0x4 - core index']
  #allocation1 [shape = 'u32[72,128]{1,0:T(1,128)}', space=vmem, size = 0x9000, scoped, tag = 'internal scratch']
  %s0 = inlined_call_operand.vmem [shape: s32[16,1], index: 0, kind: input, shape index: {}]
  %s1 = inlined_call_operand.vmem [shape: bf16[16,92], index: 1, kind: input, shape index: {}]
  %s2 = inlined_call_operand.vmem [shape: bf16[16,256], index: 2, kind: input, shape index: {}]
  %s3 = inlined_call_operand.vmem [shape: bf16[92,256], index: 3, kind: input, shape index: {}]
  %s4 = inlined_call_operand.vmem [shape: f32[1,256], index: 4, kind: input, shape index: {}]
  %s5 = inlined_call_operand.hbm [shape: bf16[256,512], index: 5, kind: input, shape index: {}]
  %s6 = inlined_call_operand.vmem [shape: f32[1,512], index: 6, kind: input, shape index: {}]
  %s7 = inlined_call_operand.hbm [shape: bf16[512,512], index: 7, kind: input, shape index: {}]
  %s8 = inlined_call_operand.vmem [shape: f32[1,512], index: 8, kind: input, shape index: {}]
  %s9 = inlined_call_operand.vmem [shape: bf16[512,128], index: 9, kind: input, shape index: {}]
  %s10 = inlined_call_operand.vmem [shape: f32[1,128], index: 10, kind: input, shape index: {}]
  %s11 = inlined_call_operand.vmem [shape: f32[16,128], index: 11, kind: output, shape index: {}]
  %s12 = sld [smem:[#allocation0]]
  $region62: #{generator_forward.1} parent=0
    _
  %s14 = ssub.s32 1, %s12
  %s15 = scalar_select 0, %s14, %s12
  $region1: #{generator_forward.1} parent=0
    #allocation2 [shape = 'u8[262144]{0}', space=vmem, size = 0x40000, scoped, tag = 'input window, operand 5, single buffered']
    #allocation3 [shape = 's32[1]{0}', space=sflag, size = 0x4, scoped, tag = 'scoped memory for generator_forward.1']
    #allocation4 [shape = 'u8[524288]{0}', space=vmem, size = 0x80000, scoped, tag = 'input window, operand 7, single buffered']
    #allocation5 [shape = 's32[1]{0}', space=sflag, size = 0x4, scoped, tag = 'scoped memory for generator_forward.1']
    %16 = vsyncpa [#allocation3], 0
    %17 = vsyncpa [#allocation5], 0
    // Predicated region
    $region2: #{generator_forward.1} parent=1 // pred_check
      _
    $region3: #{generator_forward.1} parent=1 // pred_check_branch
      %19 = sbr.rel (0) target = $region5
    $region4: #{generator_forward.1} parent=1 // pred_region
      _
    $region5: #{generator_forward.1} parent=1 // pred_fallthru
      _
    // Predicated region
    $region6: #{generator_forward.1} parent=1 // pred_check
      _
    $region7: #{generator_forward.1} parent=1 // pred_check_branch
      %21 = sbr.rel (0) target = $region9
    $region8: #{generator_forward.1} parent=1 // pred_region
      _
    $region9: #{generator_forward.1} parent=1 // pred_fallthru
      _
    // Predicated region
    $region10: #{generator_forward.1} parent=1 // pred_check
      _
    $region11: #{generator_forward.1} parent=1 // pred_check_branch
      %23 = sbr.rel (0) target = $region13
    $region12: #{generator_forward.1} parent=1 // pred_region
      _
    $region13: #{generator_forward.1} parent=1 // pred_fallthru
      _
    // Predicated region
    $region14: #{generator_forward.1} parent=1 // pred_check
      _
    $region15: #{generator_forward.1} parent=1 // pred_check_branch
      %25 = sbr.rel (0) target = $region17
    $region16: #{generator_forward.1} parent=1 // pred_region
      _
    $region17: #{generator_forward.1} parent=1 // pred_fallthru
      _
    // Predicated region
    $region18: #{generator_forward.1} parent=1 // pred_check
      _
    $region19: #{generator_forward.1} parent=1 // pred_check_branch
      %27 = sbr.rel (0) target = $region21
    $region20: #{generator_forward.1} parent=1 // pred_region
      _
    $region21: #{generator_forward.1} parent=1 // pred_fallthru
      _
    // Predicated region
    $region22: #{generator_forward.1} parent=1 // pred_check
      _
    $region23: #{generator_forward.1} parent=1 // pred_check_branch
      %29 = sbr.rel (0) target = $region25
    $region24: #{generator_forward.1} parent=1 // pred_region
      %31 = vsyncadd [#allocation3], 0
      %s32 = sshll.u32 %s5, 4
      %s33 = int_to_ptr.hbm [resolvable:$true] %s32
      %s34 = sshll.u32 [#allocation2], 4
      %s35 = int_to_ptr.vmem [resolvable:$true] %s34
      %40 = dma.hbm_to_vmem [thread:$0]  %s33, 8192, %s35, [#allocation3], 256, 256, 16
    $region25: #{generator_forward.1} parent=1 // pred_fallthru
      _
    // Predicated region
    $region26: #{generator_forward.1} parent=1 // pred_check
      _
    $region27: #{generator_forward.1} parent=1 // pred_check_branch
      %42 = sbr.rel (0) target = $region29
    $region28: #{generator_forward.1} parent=1 // pred_region
      _
    $region29: #{generator_forward.1} parent=1 // pred_fallthru
      _
    // Predicated region
    $region30: #{generator_forward.1} parent=1 // pred_check
      _
    $region31: #{generator_forward.1} parent=1 // pred_check_branch
      %44 = sbr.rel (0) target = $region33
    $region32: #{generator_forward.1} parent=1 // pred_region
      %46 = vsyncadd [#allocation5], 0
      %s47 = sshll.u32 %s7, 4
      %s48 = int_to_ptr.hbm [resolvable:$true] %s47
      %s49 = sshll.u32 [#allocation4], 4
      %s50 = int_to_ptr.vmem [resolvable:$true] %s49
      %55 = dma.hbm_to_vmem [thread:$0]  %s48, 16384, %s50, [#allocation5], 256, 256, 16
    $region33: #{generator_forward.1} parent=1 // pred_fallthru
      _
    // Predicated region
    $region34: #{generator_forward.1} parent=1 // pred_check
      _
    $region35: #{generator_forward.1} parent=1 // pred_check_branch
      %57 = sbr.rel (0) target = $region37
    $region36: #{generator_forward.1} parent=1 // pred_region
      _
    $region37: #{generator_forward.1} parent=1 // pred_fallthru
      _
    // Predicated region
    $region38: #{generator_forward.1} parent=1 // pred_check
      _
    $region39: #{generator_forward.1} parent=1 // pred_check_branch
      %59 = sbr.rel (0) target = $region41
    $region40: #{generator_forward.1} parent=1 // pred_region
      _
    $region41: #{generator_forward.1} parent=1 // pred_fallthru
      _
    // Predicated region
    $region42: #{generator_forward.1} parent=1 // pred_check
      _
    $region43: #{generator_forward.1} parent=1 // pred_check_branch
      %61 = sbr.rel (0) target = $region45
    $region44: #{generator_forward.1} parent=1 // pred_region
      _
    $region45: #{generator_forward.1} parent=1 // pred_fallthru
      _
    // Predicated region
    $region46: #{generator_forward.1} parent=1 // pred_check
      _
    $region47: #{generator_forward.1} parent=1 // pred_check_branch
      %63 = sbr.rel (0) target = $region49
    $region48: #{generator_forward.1} parent=1 // pred_region
      %65 = dma.done [#allocation3], 8192
    $region49: #{generator_forward.1} parent=1 // pred_fallthru
      _
    // Predicated region
    $region50: #{generator_forward.1} parent=1 // pred_check
      _
    $region51: #{generator_forward.1} parent=1 // pred_check_branch
      %67 = sbr.rel (0) target = $region53
    $region52: #{generator_forward.1} parent=1 // pred_region
      %69 = dma.done [#allocation5], 16384
    $region53: #{generator_forward.1} parent=1 // pred_fallthru
      _
    %v71 = vld [vmem:[%s0] sm:$0xff]
    %v72 = vld [vmem:[%s0 + $0x8] sm:$0xff]
    %v73 = vlaneseq
    %v74 = vand.u32 %v73, 127
    %75 = vset.pattern.permute.xlu0 0
    %76 = vperm.xlu0 %75, %v71
    %v77 = vpop.permute.xlu0 %76
    %78 = vset.pattern.permute.xlu0 0
    %79 = vperm.xlu0 %78, %v72
    %v80 = vpop.permute.xlu0 %79
    %vm81 = vcmp.eq.s32.totalorder %v77, %v74
    %vm82 = vcmp.eq.s32.totalorder %v80, %v74
    %v83 = vsel %vm81, 1, 0
    %v84 = vsel %vm82, 1, 0
    %v85 = vcvt.s32.f32 %v83
    %v86 = vcvt.s32.f32 %v84
    %v87 = vpack.c.bf16 %v86, %v85
    %v88 = vld [vmem:[%s2] sm:$0xff]
    %v89 = vld [vmem:[%s2 + $0x8] sm:$0xff]
    %v90 = vld [vmem:[%s1] sm:$0xf]
    %v91 = vld [vmem:[%s1 + $0x4] sm:$0xf]
    %v92 = vld [vmem:[%s3] sm:$0xff]
    %v93 = vld [vmem:[%s3 + $0x8] sm:$0xff]
    %v94 = vld [vmem:[%s3 + $0x10] sm:$0xff]
    %v95 = vld [vmem:[%s3 + $0x18] sm:$0xff]
    %v96 = vld [vmem:[%s3 + $0x20] sm:$0xff]
    %v97 = vld [vmem:[%s3 + $0x28] sm:$0xff]
    %v98 = vld [vmem:[%s3 + $0x30] sm:$0xff]
    %v99 = vld [vmem:[%s3 + $0x38] sm:$0xff]
    %v100 = vld [vmem:[%s3 + $0x40] sm:$0xff]
    %v101 = vld [vmem:[%s3 + $0x48] sm:$0xff]
    %v102 = vld [vmem:[%s3 + $0x50] sm:$0xff]
    %v103 = vld [vmem:[%s3 + $0x58] sm:$0x33]
    %v106 = vunpack.c.l.b16 %v90
    %v107 = vunpack.c.l.b16 %v91
    %v108 = vpack.c.b16 %v107, %v106
    %v121 = vunpack.c.l.b16 %v92
    %v122 = vunpack.c.h.b16 %v92
    %v123 = vunpack.c.l.b16 %v93
    %v124 = vunpack.c.h.b16 %v93
    %v125 = vunpack.c.l.b16 %v94
    %v126 = vunpack.c.h.b16 %v94
    %v127 = vunpack.c.l.b16 %v95
    %v128 = vunpack.c.h.b16 %v95
    %v129 = vunpack.c.l.b16 %v96
    %v130 = vunpack.c.h.b16 %v96
    %v131 = vunpack.c.l.b16 %v97
    %v132 = vunpack.c.h.b16 %v97
    %v133 = vunpack.c.l.b16 %v98
    %v134 = vunpack.c.h.b16 %v98
    %v135 = vunpack.c.l.b16 %v99
    %v136 = vunpack.c.h.b16 %v99
    %v137 = vunpack.c.l.b16 %v100
    %v138 = vunpack.c.h.b16 %v100
    %v139 = vunpack.c.l.b16 %v101
    %v140 = vunpack.c.h.b16 %v101
    %v141 = vunpack.c.l.b16 %v102
    %v142 = vunpack.c.h.b16 %v102
    %v143 = vunpack.c.l.b16 %v103
    %v144 = vunpack.c.h.b16 %v103
    %v145 = vpack.c.b16 %v123, %v121
    %v146 = vpack.c.b16 %v124, %v122
    %v147 = vpack.c.b16 %v127, %v125
    %v148 = vpack.c.b16 %v128, %v126
    %v149 = vpack.c.b16 %v131, %v129
    %v150 = vpack.c.b16 %v132, %v130
    %v151 = vpack.c.b16 %v135, %v133
    %v152 = vpack.c.b16 %v136, %v134
    %v153 = vpack.c.b16 %v139, %v137
    %v154 = vpack.c.b16 %v140, %v138
    %v155 = vpack.c.b16 %v143, %v141
    %v156 = vpack.c.b16 %v144, %v142
    %vm167 = vcmask 752640
    %v169 = vsel %vm167, %v108, 0
    %vm171 = vcmask 1045504
    %v173 = vsel %vm171, %v155, 0
    %v176 = vsel %vm171, %v156, 0
    %178 = vmatpush.bf16.msra.mxu0 0
    %179 = vmatpush.bf16.msra.mxu0 0
    %180 = vmatpush.bf16.msra.mxu0 %v173
    %181 = vmatpush.bf16.msra.mxu0 %v153
    %182 = vmatpush.bf16.msra.mxu0 %v151
    %183 = vmatpush.bf16.msra.mxu0 %v149
    %184 = vmatpush.bf16.msra.mxu0 %v147
    %185 = vmatpush.bf16.msra.mxu0 %v145
    %186 = vmatmul.bf16.gmra.mxu0 %v169
    %v187 = vpop.f32.mrf.mxu0
    %v188 = vadd.f32 0.0, %v187
    %v189 = vpop.f32.mrf.mxu0
    %v190 = vadd.f32 0.0, %v189
    %191 = vdwg.mxu0
    %192 = vmatpush.bf16.msra.mxu0 0
    %193 = vmatpush.bf16.msra.mxu0 0
    %194 = vmatpush.bf16.msra.mxu0 %v176
    %195 = vmatpush.bf16.msra.mxu0 %v154
    %196 = vmatpush.bf16.msra.mxu0 %v152
    %197 = vmatpush.bf16.msra.mxu0 %v150
    %198 = vmatpush.bf16.msra.mxu0 %v148
    %199 = vmatpush.bf16.msra.mxu0 %v146
    %200 = vmatmul.bf16.gmra.mxu0 %v169
    %v201 = vpop.f32.mrf.mxu0
    %v202 = vadd.f32 0.0, %v201
    %v203 = vpop.f32.mrf.mxu0
    %v204 = vadd.f32 0.0, %v203
    %205 = vdwg.mxu0
    %v208 = vunpack.c.l.b16 %v88
    %v209 = vunpack.c.h.b16 %v88
    %v210 = vunpack.c.l.b16 %v89
    %v211 = vunpack.c.h.b16 %v89
    %v212 = vpack.c.b16 %v210, %v208
    %v213 = vpack.c.b16 %v211, %v209
    %vm216 = vcmask 130048
    %v218 = vsel %vm216, %v87, 0
    %220 = vmatpush.bf16.msra.mxu0 0
    %221 = vmatpush.bf16.msra.mxu0 0
    %222 = vmatpush.bf16.msra.mxu0 0
    %223 = vmatpush.bf16.msra.mxu0 0
    %224 = vmatpush.bf16.msra.mxu0 0
    %225 = vmatpush.bf16.msra.mxu0 0
    %226 = vmatpush.bf16.msra.mxu0 0
    %227 = vmatpush.bf16.msra.mxu0 %v212
    %228 = vmatmul.bf16.gmra.mxu0 %v218
    %v229 = vpop.f32.mrf.mxu0
    %v230 = vadd.f32 %v188, %v229
    %v231 = vpop.f32.mrf.mxu0
    %v232 = vadd.f32 %v190, %v231
    %233 = vdwg.mxu0
    %234 = vmatpush.bf16.msra.mxu0 0
    %235 = vmatpush.bf16.msra.mxu0 0
    %236 = vmatpush.bf16.msra.mxu0 0
    %237 = vmatpush.bf16.msra.mxu0 0
    %238 = vmatpush.bf16.msra.mxu0 0
    %239 = vmatpush.bf16.msra.mxu0 0
    %240 = vmatpush.bf16.msra.mxu0 0
    %241 = vmatpush.bf16.msra.mxu0 %v213
    %242 = vmatmul.bf16.gmra.mxu0 %v218
    %v243 = vpop.f32.mrf.mxu0
    %v244 = vadd.f32 %v202, %v243
    %v245 = vpop.f32.mrf.mxu0
    %v246 = vadd.f32 %v204, %v245
    %247 = vdwg.mxu0
    %v248 = vld [vmem:[%s4] sm:$0x3]
    %v250 = vperm.slane %v248, 0
    %v251 = vperm.slane %v248, 1
    %v254 = vadd.f32 %v230, %v250
    %v255 = vadd.f32 %v244, %v251
    %v256 = vadd.f32 %v232, %v250
    %v257 = vadd.f32 %v246, %v251
    %v258 = vmax.f32 %v254, 0.0
    %v259 = vmax.f32 %v255, 0.0
    %v260 = vmax.f32 %v256, 0.0
    %v261 = vmax.f32 %v257, 0.0
    %v262 = vpack.c.bf16 %v260, %v258
    %v263 = vpack.c.bf16 %v261, %v259
    %v264 = vld [vmem:[#allocation2] sm:$0xff]
    %v265 = vld [vmem:[#allocation2 + $0x8] sm:$0xff]
    %v266 = vld [vmem:[#allocation2 + $0x10] sm:$0xff]
    %v267 = vld [vmem:[#allocation2 + $0x18] sm:$0xff]
    %v268 = vld [vmem:[#allocation2 + $0x20] sm:$0xff]
    %v269 = vld [vmem:[#allocation2 + $0x28] sm:$0xff]
    %v270 = vld [vmem:[#allocation2 + $0x30] sm:$0xff]
    %v271 = vld [vmem:[#allocation2 + $0x38] sm:$0xff]
    %v272 = vld [vmem:[#allocation2 + $0x40] sm:$0xff]
    %v273 = vld [vmem:[#allocation2 + $0x48] sm:$0xff]
    %v274 = vld [vmem:[#allocation2 + $0x50] sm:$0xff]
    %v275 = vld [vmem:[#allocation2 + $0x58] sm:$0xff]
    %v276 = vld [vmem:[#allocation2 + $0x60] sm:$0xff]
    %v277 = vld [vmem:[#allocation2 + $0x68] sm:$0xff]
    %v278 = vld [vmem:[#allocation2 + $0x70] sm:$0xff]
    %v279 = vld [vmem:[#allocation2 + $0x78] sm:$0xff]
    %v280 = vld [vmem:[#allocation2 + $0x80] sm:$0xff]
    %v281 = vld [vmem:[#allocation2 + $0x88] sm:$0xff]
    %v282 = vld [vmem:[#allocation2 + $0x90] sm:$0xff]
    %v283 = vld [vmem:[#allocation2 + $0x98] sm:$0xff]
    %v284 = vld [vmem:[#allocation2 + $0xa0] sm:$0xff]
    %v285 = vld [vmem:[#allocation2 + $0xa8] sm:$0xff]
    %v286 = vld [vmem:[#allocation2 + $0xb0] sm:$0xff]
    %v287 = vld [vmem:[#allocation2 + $0xb8] sm:$0xff]
    %v288 = vld [vmem:[#allocation2 + $0xc0] sm:$0xff]
    %v289 = vld [vmem:[#allocation2 + $0xc8] sm:$0xff]
    %v290 = vld [vmem:[#allocation2 + $0xd0] sm:$0xff]
    %v291 = vld [vmem:[#allocation2 + $0xd8] sm:$0xff]
    %v292 = vld [vmem:[#allocation2 + $0xe0] sm:$0xff]
    %v293 = vld [vmem:[#allocation2 + $0xe8] sm:$0xff]
    %v294 = vld [vmem:[#allocation2 + $0xf0] sm:$0xff]
    %v295 = vld [vmem:[#allocation2 + $0xf8] sm:$0xff]
    %v296 = vld [vmem:[#allocation2 + $0x100] sm:$0xff]
    %v297 = vld [vmem:[#allocation2 + $0x108] sm:$0xff]
    %v298 = vld [vmem:[#allocation2 + $0x110] sm:$0xff]
    %v299 = vld [vmem:[#allocation2 + $0x118] sm:$0xff]
    %v300 = vld [vmem:[#allocation2 + $0x120] sm:$0xff]
    %v301 = vld [vmem:[#allocation2 + $0x128] sm:$0xff]
    %v302 = vld [vmem:[#allocation2 + $0x130] sm:$0xff]
    %v303 = vld [vmem:[#allocation2 + $0x138] sm:$0xff]
    %v304 = vld [vmem:[#allocation2 + $0x140] sm:$0xff]
    %v305 = vld [vmem:[#allocation2 + $0x148] sm:$0xff]
    %v306 = vld [vmem:[#allocation2 + $0x150] sm:$0xff]
    %v307 = vld [vmem:[#allocation2 + $0x158] sm:$0xff]
    %v308 = vld [vmem:[#allocation2 + $0x160] sm:$0xff]
    %v309 = vld [vmem:[#allocation2 + $0x168] sm:$0xff]
    %v310 = vld [vmem:[#allocation2 + $0x170] sm:$0xff]
    %v311 = vld [vmem:[#allocation2 + $0x178] sm:$0xff]
    %v312 = vld [vmem:[#allocation2 + $0x180] sm:$0xff]
    %v313 = vld [vmem:[#allocation2 + $0x188] sm:$0xff]
    %v314 = vld [vmem:[#allocation2 + $0x190] sm:$0xff]
    %v315 = vld [vmem:[#allocation2 + $0x198] sm:$0xff]
    %v316 = vld [vmem:[#allocation2 + $0x1a0] sm:$0xff]
    %v317 = vld [vmem:[#allocation2 + $0x1a8] sm:$0xff]
    %v318 = vld [vmem:[#allocation2 + $0x1b0] sm:$0xff]
    %v319 = vld [vmem:[#allocation2 + $0x1b8] sm:$0xff]
    %v320 = vld [vmem:[#allocation2 + $0x1c0] sm:$0xff]
    %v321 = vld [vmem:[#allocation2 + $0x1c8] sm:$0xff]
    %v322 = vld [vmem:[#allocation2 + $0x1d0] sm:$0xff]
    %v323 = vld [vmem:[#allocation2 + $0x1d8] sm:$0xff]
    %v324 = vld [vmem:[#allocation2 + $0x1e0] sm:$0xff]
    %v325 = vld [vmem:[#allocation2 + $0x1e8] sm:$0xff]
    %v326 = vld [vmem:[#allocation2 + $0x1f0] sm:$0xff]
    %v327 = vld [vmem:[#allocation2 + $0x1f8] sm:$0xff]
    %v328 = vld [vmem:[%s6] sm:$0xf]
    %v330 = vperm.slane %v328, 0
    %v331 = vperm.slane %v328, 1
    %v332 = vperm.slane %v328, 2
    %v333 = vperm.slane %v328, 3
    %v402 = vunpack.c.l.b16 %v264
    %v403 = vunpack.c.h.b16 %v264
    %v404 = vunpack.c.l.b16 %v265
    %v405 = vunpack.c.h.b16 %v265
    %v406 = vunpack.c.l.b16 %v266
    %v407 = vunpack.c.h.b16 %v266
    %v408 = vunpack.c.l.b16 %v267
    %v409 = vunpack.c.h.b16 %v267
    %v410 = vunpack.c.l.b16 %v268
    %v411 = vunpack.c.h.b16 %v268
    %v412 = vunpack.c.l.b16 %v269
    %v413 = vunpack.c.h.b16 %v269
    %v414 = vunpack.c.l.b16 %v270
    %v415 = vunpack.c.h.b16 %v270
    %v416 = vunpack.c.l.b16 %v271
    %v417 = vunpack.c.h.b16 %v271
    %v418 = vunpack.c.l.b16 %v272
    %v419 = vunpack.c.h.b16 %v272
    %v420 = vunpack.c.l.b16 %v273
    %v421 = vunpack.c.h.b16 %v273
    %v422 = vunpack.c.l.b16 %v274
    %v423 = vunpack.c.h.b16 %v274
    %v424 = vunpack.c.l.b16 %v275
    %v425 = vunpack.c.h.b16 %v275
    %v426 = vunpack.c.l.b16 %v276
    %v427 = vunpack.c.h.b16 %v276
    %v428 = vunpack.c.l.b16 %v277
    %v429 = vunpack.c.h.b16 %v277
    %v430 = vunpack.c.l.b16 %v278
    %v431 = vunpack.c.h.b16 %v278
    %v432 = vunpack.c.l.b16 %v279
    %v433 = vunpack.c.h.b16 %v279
    %v434 = vunpack.c.l.b16 %v280
    %v435 = vunpack.c.h.b16 %v280
    %v436 = vunpack.c.l.b16 %v281
    %v437 = vunpack.c.h.b16 %v281
    %v438 = vunpack.c.l.b16 %v282
    %v439 = vunpack.c.h.b16 %v282
    %v440 = vunpack.c.l.b16 %v283
    %v441 = vunpack.c.h.b16 %v283
    %v442 = vunpack.c.l.b16 %v284
    %v443 = vunpack.c.h.b16 %v284
    %v444 = vunpack.c.l.b16 %v285
    %v445 = vunpack.c.h.b16 %v285
    %v446 = vunpack.c.l.b16 %v286
    %v447 = vunpack.c.h.b16 %v286
    %v448 = vunpack.c.l.b16 %v287
    %v449 = vunpack.c.h.b16 %v287
    %v450 = vunpack.c.l.b16 %v288
    %v451 = vunpack.c.h.b16 %v288
    %v452 = vunpack.c.l.b16 %v289
    %v453 = vunpack.c.h.b16 %v289
    %v454 = vunpack.c.l.b16 %v290
    %v455 = vunpack.c.h.b16 %v290
    %v456 = vunpack.c.l.b16 %v291
    %v457 = vunpack.c.h.b16 %v291
    %v458 = vunpack.c.l.b16 %v292
    %v459 = vunpack.c.h.b16 %v292
    %v460 = vunpack.c.l.b16 %v293
    %v461 = vunpack.c.h.b16 %v293
    %v462 = vunpack.c.l.b16 %v294
    %v463 = vunpack.c.h.b16 %v294
    %v464 = vunpack.c.l.b16 %v295
    %v465 = vunpack.c.h.b16 %v295
    %v466 = vunpack.c.l.b16 %v296
    %v467 = vunpack.c.h.b16 %v296
    %v468 = vunpack.c.l.b16 %v297
    %v469 = vunpack.c.h.b16 %v297
    %v470 = vunpack.c.l.b16 %v298
    %v471 = vunpack.c.h.b16 %v298
    %v472 = vunpack.c.l.b16 %v299
    %v473 = vunpack.c.h.b16 %v299
    %v474 = vunpack.c.l.b16 %v300
    %v475 = vunpack.c.h.b16 %v300
    %v476 = vunpack.c.l.b16 %v301
    %v477 = vunpack.c.h.b16 %v301
    %v478 = vunpack.c.l.b16 %v302
    %v479 = vunpack.c.h.b16 %v302
    %v480 = vunpack.c.l.b16 %v303
    %v481 = vunpack.c.h.b16 %v303
    %v482 = vunpack.c.l.b16 %v304
    %v483 = vunpack.c.h.b16 %v304
    %v484 = vunpack.c.l.b16 %v305
    %v485 = vunpack.c.h.b16 %v305
    %v486 = vunpack.c.l.b16 %v306
    %v487 = vunpack.c.h.b16 %v306
    %v488 = vunpack.c.l.b16 %v307
    %v489 = vunpack.c.h.b16 %v307
    %v490 = vunpack.c.l.b16 %v308
    %v491 = vunpack.c.h.b16 %v308
    %v492 = vunpack.c.l.b16 %v309
    %v493 = vunpack.c.h.b16 %v309
    %v494 = vunpack.c.l.b16 %v310
    %v495 = vunpack.c.h.b16 %v310
    %v496 = vunpack.c.l.b16 %v311
    %v497 = vunpack.c.h.b16 %v311
    %v498 = vunpack.c.l.b16 %v312
    %v499 = vunpack.c.h.b16 %v312
    %v500 = vunpack.c.l.b16 %v313
    %v501 = vunpack.c.h.b16 %v313
    %v502 = vunpack.c.l.b16 %v314
    %v503 = vunpack.c.h.b16 %v314
    %v504 = vunpack.c.l.b16 %v315
    %v505 = vunpack.c.h.b16 %v315
    %v506 = vunpack.c.l.b16 %v316
    %v507 = vunpack.c.h.b16 %v316
    %v508 = vunpack.c.l.b16 %v317
    %v509 = vunpack.c.h.b16 %v317
    %v510 = vunpack.c.l.b16 %v318
    %v511 = vunpack.c.h.b16 %v318
    %v512 = vunpack.c.l.b16 %v319
    %v513 = vunpack.c.h.b16 %v319
    %v514 = vunpack.c.l.b16 %v320
    %v515 = vunpack.c.h.b16 %v320
    %v516 = vunpack.c.l.b16 %v321
    %v517 = vunpack.c.h.b16 %v321
    %v518 = vunpack.c.l.b16 %v322
    %v519 = vunpack.c.h.b16 %v322
    %v520 = vunpack.c.l.b16 %v323
    %v521 = vunpack.c.h.b16 %v323
    %v522 = vunpack.c.l.b16 %v324
    %v523 = vunpack.c.h.b16 %v324
    %v524 = vunpack.c.l.b16 %v325
    %v525 = vunpack.c.h.b16 %v325
    %v526 = vunpack.c.l.b16 %v326
    %v527 = vunpack.c.h.b16 %v326
    %v528 = vunpack.c.l.b16 %v327
    %v529 = vunpack.c.h.b16 %v327
    %v530 = vpack.c.b16 %v406, %v402
    %v531 = vpack.c.b16 %v407, %v403
    %v532 = vpack.c.b16 %v408, %v404
    %v533 = vpack.c.b16 %v409, %v405
    %v534 = vpack.c.b16 %v414, %v410
    %v535 = vpack.c.b16 %v415, %v411
    %v536 = vpack.c.b16 %v416, %v412
    %v537 = vpack.c.b16 %v417, %v413
    %v538 = vpack.c.b16 %v422, %v418
    %v539 = vpack.c.b16 %v423, %v419
    %v540 = vpack.c.b16 %v424, %v420
    %v541 = vpack.c.b16 %v425, %v421
    %v542 = vpack.c.b16 %v430, %v426
    %v543 = vpack.c.b16 %v431, %v427
    %v544 = vpack.c.b16 %v432, %v428
    %v545 = vpack.c.b16 %v433, %v429
    %v546 = vpack.c.b16 %v438, %v434
    %v547 = vpack.c.b16 %v439, %v435
    %v548 = vpack.c.b16 %v440, %v436
    %v549 = vpack.c.b16 %v441, %v437
    %v550 = vpack.c.b16 %v446, %v442
    %v551 = vpack.c.b16 %v447, %v443
    %v552 = vpack.c.b16 %v448, %v444
    %v553 = vpack.c.b16 %v449, %v445
    %v554 = vpack.c.b16 %v454, %v450
    %v555 = vpack.c.b16 %v455, %v451
    %v556 = vpack.c.b16 %v456, %v452
    %v557 = vpack.c.b16 %v457, %v453
    %v558 = vpack.c.b16 %v462, %v458
    %v559 = vpack.c.b16 %v463, %v459
    %v560 = vpack.c.b16 %v464, %v460
    %v561 = vpack.c.b16 %v465, %v461
    %v562 = vpack.c.b16 %v470, %v466
    %v563 = vpack.c.b16 %v471, %v467
    %v564 = vpack.c.b16 %v472, %v468
    %v565 = vpack.c.b16 %v473, %v469
    %v566 = vpack.c.b16 %v478, %v474
    %v567 = vpack.c.b16 %v479, %v475
    %v568 = vpack.c.b16 %v480, %v476
    %v569 = vpack.c.b16 %v481, %v477
    %v570 = vpack.c.b16 %v486, %v482
    %v571 = vpack.c.b16 %v487, %v483
    %v572 = vpack.c.b16 %v488, %v484
    %v573 = vpack.c.b16 %v489, %v485
    %v574 = vpack.c.b16 %v494, %v490
    %v575 = vpack.c.b16 %v495, %v491
    %v576 = vpack.c.b16 %v496, %v492
    %v577 = vpack.c.b16 %v497, %v493
    %v578 = vpack.c.b16 %v502, %v498
    %v579 = vpack.c.b16 %v503, %v499
    %v580 = vpack.c.b16 %v504, %v500
    %v581 = vpack.c.b16 %v505, %v501
    %v582 = vpack.c.b16 %v510, %v506
    %v583 = vpack.c.b16 %v511, %v507
    %v584 = vpack.c.b16 %v512, %v508
    %v585 = vpack.c.b16 %v513, %v509
    %v586 = vpack.c.b16 %v518, %v514
    %v587 = vpack.c.b16 %v519, %v515
    %v588 = vpack.c.b16 %v520, %v516
    %v589 = vpack.c.b16 %v521, %v517
    %v590 = vpack.c.b16 %v526, %v522
    %v591 = vpack.c.b16 %v527, %v523
    %v592 = vpack.c.b16 %v528, %v524
    %v593 = vpack.c.b16 %v529, %v525
    %658 = vmatpush.bf16.msra.mxu0 %v558
    %659 = vmatpush.bf16.msra.mxu0 %v554
    %660 = vmatpush.bf16.msra.mxu0 %v550
    %661 = vmatpush.bf16.msra.mxu0 %v546
    %662 = vmatpush.bf16.msra.mxu0 %v542
    %663 = vmatpush.bf16.msra.mxu0 %v538
    %664 = vmatpush.bf16.msra.mxu0 %v534
    %665 = vmatpush.bf16.msra.mxu0 %v530
    %666 = vmatmul.bf16.gmra.mxu0 %v262
    %v667 = vpop.f32.mrf.mxu0
    %v668 = vadd.f32 %v330, %v667
    %v669 = vpop.f32.mrf.mxu0
    %v670 = vadd.f32 %v330, %v669
    %671 = vdwg.mxu0
    %672 = vmatpush.bf16.msra.mxu0 %v590
    %673 = vmatpush.bf16.msra.mxu0 %v586
    %674 = vmatpush.bf16.msra.mxu0 %v582
    %675 = vmatpush.bf16.msra.mxu0 %v578
    %676 = vmatpush.bf16.msra.mxu0 %v574
    %677 = vmatpush.bf16.msra.mxu0 %v570
    %678 = vmatpush.bf16.msra.mxu0 %v566
    %679 = vmatpush.bf16.msra.mxu0 %v562
    %680 = vmatmul.bf16.gmra.mxu0 %v263
    %v681 = vpop.f32.mrf.mxu0
    %v682 = vadd.f32 %v668, %v681
    %v683 = vpop.f32.mrf.mxu0
    %v684 = vadd.f32 %v670, %v683
    %685 = vdwg.mxu0
    %686 = vmatpush.bf16.msra.mxu0 %v559
    %687 = vmatpush.bf16.msra.mxu0 %v555
    %688 = vmatpush.bf16.msra.mxu0 %v551
    %689 = vmatpush.bf16.msra.mxu0 %v547
    %690 = vmatpush.bf16.msra.mxu0 %v543
    %691 = vmatpush.bf16.msra.mxu0 %v539
    %692 = vmatpush.bf16.msra.mxu0 %v535
    %693 = vmatpush.bf16.msra.mxu0 %v531
    %694 = vmatmul.bf16.gmra.mxu0 %v262
    %v695 = vpop.f32.mrf.mxu0
    %v696 = vadd.f32 %v331, %v695
    %v697 = vpop.f32.mrf.mxu0
    %v698 = vadd.f32 %v331, %v697
    %699 = vdwg.mxu0
    %700 = vmatpush.bf16.msra.mxu0 %v591
    %701 = vmatpush.bf16.msra.mxu0 %v587
    %702 = vmatpush.bf16.msra.mxu0 %v583
    %703 = vmatpush.bf16.msra.mxu0 %v579
    %704 = vmatpush.bf16.msra.mxu0 %v575
    %705 = vmatpush.bf16.msra.mxu0 %v571
    %706 = vmatpush.bf16.msra.mxu0 %v567
    %707 = vmatpush.bf16.msra.mxu0 %v563
    %708 = vmatmul.bf16.gmra.mxu0 %v263
    %v709 = vpop.f32.mrf.mxu0
    %v710 = vadd.f32 %v696, %v709
    %v711 = vpop.f32.mrf.mxu0
    %v712 = vadd.f32 %v698, %v711
    %713 = vdwg.mxu0
    %714 = vmatpush.bf16.msra.mxu0 %v560
    %715 = vmatpush.bf16.msra.mxu0 %v556
    %716 = vmatpush.bf16.msra.mxu0 %v552
    %717 = vmatpush.bf16.msra.mxu0 %v548
    %718 = vmatpush.bf16.msra.mxu0 %v544
    %719 = vmatpush.bf16.msra.mxu0 %v540
    %720 = vmatpush.bf16.msra.mxu0 %v536
    %721 = vmatpush.bf16.msra.mxu0 %v532
    %722 = vmatmul.bf16.gmra.mxu0 %v262
    %v723 = vpop.f32.mrf.mxu0
    %v724 = vadd.f32 %v332, %v723
    %v725 = vpop.f32.mrf.mxu0
    %v726 = vadd.f32 %v332, %v725
    %727 = vdwg.mxu0
    %728 = vmatpush.bf16.msra.mxu0 %v592
    %729 = vmatpush.bf16.msra.mxu0 %v588
    %730 = vmatpush.bf16.msra.mxu0 %v584
    %731 = vmatpush.bf16.msra.mxu0 %v580
    %732 = vmatpush.bf16.msra.mxu0 %v576
    %733 = vmatpush.bf16.msra.mxu0 %v572
    %734 = vmatpush.bf16.msra.mxu0 %v568
    %735 = vmatpush.bf16.msra.mxu0 %v564
    %736 = vmatmul.bf16.gmra.mxu0 %v263
    %v737 = vpop.f32.mrf.mxu0
    %v738 = vadd.f32 %v724, %v737
    %v739 = vpop.f32.mrf.mxu0
    %v740 = vadd.f32 %v726, %v739
    %741 = vdwg.mxu0
    %742 = vmatpush.bf16.msra.mxu0 %v561
    %743 = vmatpush.bf16.msra.mxu0 %v557
    %744 = vmatpush.bf16.msra.mxu0 %v553
    %745 = vmatpush.bf16.msra.mxu0 %v549
    %746 = vmatpush.bf16.msra.mxu0 %v545
    %747 = vmatpush.bf16.msra.mxu0 %v541
    %748 = vmatpush.bf16.msra.mxu0 %v537
    %749 = vmatpush.bf16.msra.mxu0 %v533
    %750 = vmatmul.bf16.gmra.mxu0 %v262
    %v751 = vpop.f32.mrf.mxu0
    %v752 = vadd.f32 %v333, %v751
    %v753 = vpop.f32.mrf.mxu0
    %v754 = vadd.f32 %v333, %v753
    %755 = vdwg.mxu0
    %756 = vmatpush.bf16.msra.mxu0 %v593
    %757 = vmatpush.bf16.msra.mxu0 %v589
    %758 = vmatpush.bf16.msra.mxu0 %v585
    %759 = vmatpush.bf16.msra.mxu0 %v581
    %760 = vmatpush.bf16.msra.mxu0 %v577
    %761 = vmatpush.bf16.msra.mxu0 %v573
    %762 = vmatpush.bf16.msra.mxu0 %v569
    %763 = vmatpush.bf16.msra.mxu0 %v565
    %764 = vmatmul.bf16.gmra.mxu0 %v263
    %v765 = vpop.f32.mrf.mxu0
    %v766 = vadd.f32 %v752, %v765
    %v767 = vpop.f32.mrf.mxu0
    %v768 = vadd.f32 %v754, %v767
    %769 = vdwg.mxu0
    %v770 = vmax.f32 %v682, 0.0
    %v771 = vmax.f32 %v710, 0.0
    %v772 = vmax.f32 %v738, 0.0
    %v773 = vmax.f32 %v766, 0.0
    %v774 = vmax.f32 %v684, 0.0
    %v775 = vmax.f32 %v712, 0.0
    %v776 = vmax.f32 %v740, 0.0
    %v777 = vmax.f32 %v768, 0.0
    %v778 = vpack.c.bf16 %v774, %v770
    %v779 = vpack.c.bf16 %v775, %v771
    %v780 = vpack.c.bf16 %v776, %v772
    %v781 = vpack.c.bf16 %v777, %v773
    %v782 = vld [vmem:[#allocation4] sm:$0xff]
    %v783 = vld [vmem:[#allocation4 + $0x8] sm:$0xff]
    %v784 = vld [vmem:[#allocation4 + $0x10] sm:$0xff]
    %v785 = vld [vmem:[#allocation4 + $0x18] sm:$0xff]
    %v786 = vld [vmem:[#allocation4 + $0x20] sm:$0xff]
    %v787 = vld [vmem:[#allocation4 + $0x28] sm:$0xff]
    %v788 = vld [vmem:[#allocation4 + $0x30] sm:$0xff]
    %v789 = vld [vmem:[#allocation4 + $0x38] sm:$0xff]
    %v790 = vld [vmem:[#allocation4 + $0x40] sm:$0xff]
    %v791 = vld [vmem:[#allocation4 + $0x48] sm:$0xff]
    %v792 = vld [vmem:[#allocation4 + $0x50] sm:$0xff]
    %v793 = vld [vmem:[#allocation4 + $0x58] sm:$0xff]
    %v794 = vld [vmem:[#allocation4 + $0x60] sm:$0xff]
    %v795 = vld [vmem:[#allocation4 + $0x68] sm:$0xff]
    %v796 = vld [vmem:[#allocation4 + $0x70] sm:$0xff]
    %v797 = vld [vmem:[#allocation4 + $0x78] sm:$0xff]
    %v798 = vld [vmem:[#allocation4 + $0x80] sm:$0xff]
    %v799 = vld [vmem:[#allocation4 + $0x88] sm:$0xff]
    %v800 = vld [vmem:[#allocation4 + $0x90] sm:$0xff]
    %v801 = vld [vmem:[#allocation4 + $0x98] sm:$0xff]
    %v802 = vld [vmem:[#allocation4 + $0xa0] sm:$0xff]
    %v803 = vld [vmem:[#allocation4 + $0xa8] sm:$0xff]
    %v804 = vld [vmem:[#allocation4 + $0xb0] sm:$0xff]
    %v805 = vld [vmem:[#allocation4 + $0xb8] sm:$0xff]
    %v806 = vld [vmem:[#allocation4 + $0xc0] sm:$0xff]
    %v807 = vld [vmem:[#allocation4 + $0xc8] sm:$0xff]
    %v808 = vld [vmem:[#allocation4 + $0xd0] sm:$0xff]
    %v809 = vld [vmem:[#allocation4 + $0xd8] sm:$0xff]
    %v810 = vld [vmem:[#allocation4 + $0xe0] sm:$0xff]
    %v811 = vld [vmem:[#allocation4 + $0xe8] sm:$0xff]
    %v812 = vld [vmem:[#allocation4 + $0xf0] sm:$0xff]
    %v813 = vld [vmem:[#allocation4 + $0xf8] sm:$0xff]
    %v814 = vld [vmem:[#allocation4 + $0x100] sm:$0xff]
    %v815 = vld [vmem:[#allocation4 + $0x108] sm:$0xff]
    %v816 = vld [vmem:[#allocation4 + $0x110] sm:$0xff]
    %v817 = vld [vmem:[#allocation4 + $0x118] sm:$0xff]
    %v818 = vld [vmem:[#allocation4 + $0x120] sm:$0xff]
    %v819 = vld [vmem:[#allocation4 + $0x128] sm:$0xff]
    %v820 = vld [vmem:[#allocation4 + $0x130] sm:$0xff]
    %v821 = vld [vmem:[#allocation4 + $0x138] sm:$0xff]
    %v822 = vld [vmem:[#allocation4 + $0x140] sm:$0xff]
    %v823 = vld [vmem:[#allocation4 + $0x148] sm:$0xff]
    %v824 = vld [vmem:[#allocation4 + $0x150] sm:$0xff]
    %v825 = vld [vmem:[#allocation4 + $0x158] sm:$0xff]
    %v826 = vld [vmem:[#allocation4 + $0x160] sm:$0xff]
    %v827 = vld [vmem:[#allocation4 + $0x168] sm:$0xff]
    %v828 = vld [vmem:[#allocation4 + $0x170] sm:$0xff]
    %v829 = vld [vmem:[#allocation4 + $0x178] sm:$0xff]
    %v830 = vld [vmem:[#allocation4 + $0x180] sm:$0xff]
    %v831 = vld [vmem:[#allocation4 + $0x188] sm:$0xff]
    %v832 = vld [vmem:[#allocation4 + $0x190] sm:$0xff]
    %v833 = vld [vmem:[#allocation4 + $0x198] sm:$0xff]
    %v834 = vld [vmem:[#allocation4 + $0x1a0] sm:$0xff]
    %v835 = vld [vmem:[#allocation4 + $0x1a8] sm:$0xff]
    %v836 = vld [vmem:[#allocation4 + $0x1b0] sm:$0xff]
    %v837 = vld [vmem:[#allocation4 + $0x1b8] sm:$0xff]
    %v838 = vld [vmem:[#allocation4 + $0x1c0] sm:$0xff]
    %v839 = vld [vmem:[#allocation4 + $0x1c8] sm:$0xff]
    %v840 = vld [vmem:[#allocation4 + $0x1d0] sm:$0xff]
    %v841 = vld [vmem:[#allocation4 + $0x1d8] sm:$0xff]
    %v842 = vld [vmem:[#allocation4 + $0x1e0] sm:$0xff]
    %v843 = vld [vmem:[#allocation4 + $0x1e8] sm:$0xff]
    %v844 = vld [vmem:[#allocation4 + $0x1f0] sm:$0xff]
    %v845 = vld [vmem:[#allocation4 + $0x1f8] sm:$0xff]
    %v846 = vld [vmem:[#allocation4 + $0x200] sm:$0xff]
    %v847 = vld [vmem:[#allocation4 + $0x208] sm:$0xff]
    %v848 = vld [vmem:[#allocation4 + $0x210] sm:$0xff]
    %v849 = vld [vmem:[#allocation4 + $0x218] sm:$0xff]
    %v850 = vld [vmem:[#allocation4 + $0x220] sm:$0xff]
    %v851 = vld [vmem:[#allocation4 + $0x228] sm:$0xff]
    %v852 = vld [vmem:[#allocation4 + $0x230] sm:$0xff]
    %v853 = vld [vmem:[#allocation4 + $0x238] sm:$0xff]
    %v854 = vld [vmem:[#allocation4 + $0x240] sm:$0xff]
    %v855 = vld [vmem:[#allocation4 + $0x248] sm:$0xff]
    %v856 = vld [vmem:[#allocation4 + $0x250] sm:$0xff]
    %v857 = vld [vmem:[#allocation4 + $0x258] sm:$0xff]
    %v858 = vld [vmem:[#allocation4 + $0x260] sm:$0xff]
    %v859 = vld [vmem:[#allocation4 + $0x268] sm:$0xff]
    %v860 = vld [vmem:[#allocation4 + $0x270] sm:$0xff]
    %v861 = vld [vmem:[#allocation4 + $0x278] sm:$0xff]
    %v862 = vld [vmem:[#allocation4 + $0x280] sm:$0xff]
    %v863 = vld [vmem:[#allocation4 + $0x288] sm:$0xff]
    %v864 = vld [vmem:[#allocation4 + $0x290] sm:$0xff]
    %v865 = vld [vmem:[#allocation4 + $0x298] sm:$0xff]
    %v866 = vld [vmem:[#allocation4 + $0x2a0] sm:$0xff]
    %v867 = vld [vmem:[#allocation4 + $0x2a8] sm:$0xff]
    %v868 = vld [vmem:[#allocation4 + $0x2b0] sm:$0xff]
    %v869 = vld [vmem:[#allocation4 + $0x2b8] sm:$0xff]
    %v870 = vld [vmem:[#allocation4 + $0x2c0] sm:$0xff]
    %v871 = vld [vmem:[#allocation4 + $0x2c8] sm:$0xff]
    %v872 = vld [vmem:[#allocation4 + $0x2d0] sm:$0xff]
    %v873 = vld [vmem:[#allocation4 + $0x2d8] sm:$0xff]
    %v874 = vld [vmem:[#allocation4 + $0x2e0] sm:$0xff]
    %v875 = vld [vmem:[#allocation4 + $0x2e8] sm:$0xff]
    %v876 = vld [vmem:[#allocation4 + $0x2f0] sm:$0xff]
    %v877 = vld [vmem:[#allocation4 + $0x2f8] sm:$0xff]
    %v878 = vld [vmem:[#allocation4 + $0x300] sm:$0xff]
    %v879 = vld [vmem:[#allocation4 + $0x308] sm:$0xff]
    %v880 = vld [vmem:[#allocation4 + $0x310] sm:$0xff]
    %v881 = vld [vmem:[#allocation4 + $0x318] sm:$0xff]
    %v882 = vld [vmem:[#allocation4 + $0x320] sm:$0xff]
    %v883 = vld [vmem:[#allocation4 + $0x328] sm:$0xff]
    %v884 = vld [vmem:[#allocation4 + $0x330] sm:$0xff]
    %v885 = vld [vmem:[#allocation4 + $0x338] sm:$0xff]
    %v886 = vld [vmem:[#allocation4 + $0x340] sm:$0xff]
    %v887 = vld [vmem:[#allocation4 + $0x348] sm:$0xff]
    %v888 = vld [vmem:[#allocation4 + $0x350] sm:$0xff]
    %v889 = vld [vmem:[#allocation4 + $0x358] sm:$0xff]
    %v890 = vld [vmem:[#allocation4 + $0x360] sm:$0xff]
    %v891 = vld [vmem:[#allocation4 + $0x368] sm:$0xff]
    %v892 = vld [vmem:[#allocation4 + $0x370] sm:$0xff]
    %v893 = vld [vmem:[#allocation4 + $0x378] sm:$0xff]
    %v894 = vld [vmem:[#allocation4 + $0x380] sm:$0xff]
    %v895 = vld [vmem:[#allocation4 + $0x388] sm:$0xff]
    %v896 = vld [vmem:[#allocation4 + $0x390] sm:$0xff]
    %v897 = vld [vmem:[#allocation4 + $0x398] sm:$0xff]
    %v898 = vld [vmem:[#allocation4 + $0x3a0] sm:$0xff]
    %v899 = vld [vmem:[#allocation4 + $0x3a8] sm:$0xff]
    %v900 = vld [vmem:[#allocation4 + $0x3b0] sm:$0xff]
    %v901 = vld [vmem:[#allocation4 + $0x3b8] sm:$0xff]
    %v902 = vld [vmem:[#allocation4 + $0x3c0] sm:$0xff]
    %v903 = vld [vmem:[#allocation4 + $0x3c8] sm:$0xff]
    %v904 = vld [vmem:[#allocation4 + $0x3d0] sm:$0xff]
    %v905 = vld [vmem:[#allocation4 + $0x3d8] sm:$0xff]
    %v906 = vld [vmem:[#allocation4 + $0x3e0] sm:$0xff]
    %v907 = vld [vmem:[#allocation4 + $0x3e8] sm:$0xff]
    %v908 = vld [vmem:[#allocation4 + $0x3f0] sm:$0xff]
    %v909 = vld [vmem:[#allocation4 + $0x3f8] sm:$0xff]
    %v910 = vld [vmem:[%s8] sm:$0xf]
    %v912 = vperm.slane %v910, 0
    %v913 = vperm.slane %v910, 1
    %v914 = vperm.slane %v910, 2
    %v915 = vperm.slane %v910, 3
    %v1048 = vunpack.c.l.b16 %v782
    %v1049 = vunpack.c.h.b16 %v782
    %v1050 = vunpack.c.l.b16 %v783
    %v1051 = vunpack.c.h.b16 %v783
    %v1052 = vunpack.c.l.b16 %v784
    %v1053 = vunpack.c.h.b16 %v784
    %v1054 = vunpack.c.l.b16 %v785
    %v1055 = vunpack.c.h.b16 %v785
    %v1056 = vunpack.c.l.b16 %v786
    %v1057 = vunpack.c.h.b16 %v786
    %v1058 = vunpack.c.l.b16 %v787
    %v1059 = vunpack.c.h.b16 %v787
    %v1060 = vunpack.c.l.b16 %v788
    %v1061 = vunpack.c.h.b16 %v788
    %v1062 = vunpack.c.l.b16 %v789
    %v1063 = vunpack.c.h.b16 %v789
    %v1064 = vunpack.c.l.b16 %v790
    %v1065 = vunpack.c.h.b16 %v790
    %v1066 = vunpack.c.l.b16 %v791
    %v1067 = vunpack.c.h.b16 %v791
    %v1068 = vunpack.c.l.b16 %v792
    %v1069 = vunpack.c.h.b16 %v792
    %v1070 = vunpack.c.l.b16 %v793
    %v1071 = vunpack.c.h.b16 %v793
    %v1072 = vunpack.c.l.b16 %v794
    %v1073 = vunpack.c.h.b16 %v794
    %v1074 = vunpack.c.l.b16 %v795
    %v1075 = vunpack.c.h.b16 %v795
    %v1076 = vunpack.c.l.b16 %v796
    %v1077 = vunpack.c.h.b16 %v796
    %v1078 = vunpack.c.l.b16 %v797
    %v1079 = vunpack.c.h.b16 %v797
    %v1080 = vunpack.c.l.b16 %v798
    %v1081 = vunpack.c.h.b16 %v798
    %v1082 = vunpack.c.l.b16 %v799
    %v1083 = vunpack.c.h.b16 %v799
    %v1084 = vunpack.c.l.b16 %v800
    %v1085 = vunpack.c.h.b16 %v800
    %v1086 = vunpack.c.l.b16 %v801
    %v1087 = vunpack.c.h.b16 %v801
    %v1088 = vunpack.c.l.b16 %v802
    %v1089 = vunpack.c.h.b16 %v802
    %v1090 = vunpack.c.l.b16 %v803
    %v1091 = vunpack.c.h.b16 %v803
    %v1092 = vunpack.c.l.b16 %v804
    %v1093 = vunpack.c.h.b16 %v804
    %v1094 = vunpack.c.l.b16 %v805
    %v1095 = vunpack.c.h.b16 %v805
    %v1096 = vunpack.c.l.b16 %v806
    %v1097 = vunpack.c.h.b16 %v806
    %v1098 = vunpack.c.l.b16 %v807
    %v1099 = vunpack.c.h.b16 %v807
    %v1100 = vunpack.c.l.b16 %v808
    %v1101 = vunpack.c.h.b16 %v808
    %v1102 = vunpack.c.l.b16 %v809
    %v1103 = vunpack.c.h.b16 %v809
    %v1104 = vunpack.c.l.b16 %v810
    %v1105 = vunpack.c.h.b16 %v810
    %v1106 = vunpack.c.l.b16 %v811
    %v1107 = vunpack.c.h.b16 %v811
    %v1108 = vunpack.c.l.b16 %v812
    %v1109 = vunpack.c.h.b16 %v812
    %v1110 = vunpack.c.l.b16 %v813
    %v1111 = vunpack.c.h.b16 %v813
    %v1112 = vunpack.c.l.b16 %v814
    %v1113 = vunpack.c.h.b16 %v814
    %v1114 = vunpack.c.l.b16 %v815
    %v1115 = vunpack.c.h.b16 %v815
    %v1116 = vunpack.c.l.b16 %v816
    %v1117 = vunpack.c.h.b16 %v816
    %v1118 = vunpack.c.l.b16 %v817
    %v1119 = vunpack.c.h.b16 %v817
    %v1120 = vunpack.c.l.b16 %v818
    %v1121 = vunpack.c.h.b16 %v818
    %v1122 = vunpack.c.l.b16 %v819
    %v1123 = vunpack.c.h.b16 %v819
    %v1124 = vunpack.c.l.b16 %v820
    %v1125 = vunpack.c.h.b16 %v820
    %v1126 = vunpack.c.l.b16 %v821
    %v1127 = vunpack.c.h.b16 %v821
    %v1128 = vunpack.c.l.b16 %v822
    %v1129 = vunpack.c.h.b16 %v822
    %v1130 = vunpack.c.l.b16 %v823
    %v1131 = vunpack.c.h.b16 %v823
    %v1132 = vunpack.c.l.b16 %v824
    %v1133 = vunpack.c.h.b16 %v824
    %v1134 = vunpack.c.l.b16 %v825
    %v1135 = vunpack.c.h.b16 %v825
    %v1136 = vunpack.c.l.b16 %v826
    %v1137 = vunpack.c.h.b16 %v826
    %v1138 = vunpack.c.l.b16 %v827
    %v1139 = vunpack.c.h.b16 %v827
    %v1140 = vunpack.c.l.b16 %v828
    %v1141 = vunpack.c.h.b16 %v828
    %v1142 = vunpack.c.l.b16 %v829
    %v1143 = vunpack.c.h.b16 %v829
    %v1144 = vunpack.c.l.b16 %v830
    %v1145 = vunpack.c.h.b16 %v830
    %v1146 = vunpack.c.l.b16 %v831
    %v1147 = vunpack.c.h.b16 %v831
    %v1148 = vunpack.c.l.b16 %v832
    %v1149 = vunpack.c.h.b16 %v832
    %v1150 = vunpack.c.l.b16 %v833
    %v1151 = vunpack.c.h.b16 %v833
    %v1152 = vunpack.c.l.b16 %v834
    %v1153 = vunpack.c.h.b16 %v834
    %v1154 = vunpack.c.l.b16 %v835
    %v1155 = vunpack.c.h.b16 %v835
    %v1156 = vunpack.c.l.b16 %v836
    %v1157 = vunpack.c.h.b16 %v836
    %v1158 = vunpack.c.l.b16 %v837
    %v1159 = vunpack.c.h.b16 %v837
    %v1160 = vunpack.c.l.b16 %v838
    %v1161 = vunpack.c.h.b16 %v838
    %v1162 = vunpack.c.l.b16 %v839
    %v1163 = vunpack.c.h.b16 %v839
    %v1164 = vunpack.c.l.b16 %v840
    %v1165 = vunpack.c.h.b16 %v840
    %v1166 = vunpack.c.l.b16 %v841
    %v1167 = vunpack.c.h.b16 %v841
    %v1168 = vunpack.c.l.b16 %v842
    %v1169 = vunpack.c.h.b16 %v842
    %v1170 = vunpack.c.l.b16 %v843
    %v1171 = vunpack.c.h.b16 %v843
    %v1172 = vunpack.c.l.b16 %v844
    %v1173 = vunpack.c.h.b16 %v844
    %v1174 = vunpack.c.l.b16 %v845
    %v1175 = vunpack.c.h.b16 %v845
    %v1176 = vunpack.c.l.b16 %v846
    %v1177 = vunpack.c.h.b16 %v846
    %v1178 = vunpack.c.l.b16 %v847
    %v1179 = vunpack.c.h.b16 %v847
    %v1180 = vunpack.c.l.b16 %v848
    %v1181 = vunpack.c.h.b16 %v848
    %v1182 = vunpack.c.l.b16 %v849
    %v1183 = vunpack.c.h.b16 %v849
    %v1184 = vunpack.c.l.b16 %v850
    %v1185 = vunpack.c.h.b16 %v850
    %v1186 = vunpack.c.l.b16 %v851
    %v1187 = vunpack.c.h.b16 %v851
    %v1188 = vunpack.c.l.b16 %v852
    %v1189 = vunpack.c.h.b16 %v852
    %v1190 = vunpack.c.l.b16 %v853
    %v1191 = vunpack.c.h.b16 %v853
    %v1192 = vunpack.c.l.b16 %v854
    %v1193 = vunpack.c.h.b16 %v854
    %v1194 = vunpack.c.l.b16 %v855
    %v1195 = vunpack.c.h.b16 %v855
    %v1196 = vunpack.c.l.b16 %v856
    %v1197 = vunpack.c.h.b16 %v856
    %v1198 = vunpack.c.l.b16 %v857
    %v1199 = vunpack.c.h.b16 %v857
    %v1200 = vunpack.c.l.b16 %v858
    %v1201 = vunpack.c.h.b16 %v858
    %v1202 = vunpack.c.l.b16 %v859
    %v1203 = vunpack.c.h.b16 %v859
    %v1204 = vunpack.c.l.b16 %v860
    %v1205 = vunpack.c.h.b16 %v860
    %v1206 = vunpack.c.l.b16 %v861
    %v1207 = vunpack.c.h.b16 %v861
    %v1208 = vunpack.c.l.b16 %v862
    %v1209 = vunpack.c.h.b16 %v862
    %v1210 = vunpack.c.l.b16 %v863
    %v1211 = vunpack.c.h.b16 %v863
    %v1212 = vunpack.c.l.b16 %v864
    %v1213 = vunpack.c.h.b16 %v864
    %v1214 = vunpack.c.l.b16 %v865
    %v1215 = vunpack.c.h.b16 %v865
    %v1216 = vunpack.c.l.b16 %v866
    %v1217 = vunpack.c.h.b16 %v866
    %v1218 = vunpack.c.l.b16 %v867
    %v1219 = vunpack.c.h.b16 %v867
    %v1220 = vunpack.c.l.b16 %v868
    %v1221 = vunpack.c.h.b16 %v868
    %v1222 = vunpack.c.l.b16 %v869
    %v1223 = vunpack.c.h.b16 %v869
    %v1224 = vunpack.c.l.b16 %v870
    %v1225 = vunpack.c.h.b16 %v870
    %v1226 = vunpack.c.l.b16 %v871
    %v1227 = vunpack.c.h.b16 %v871
    %v1228 = vunpack.c.l.b16 %v872
    %v1229 = vunpack.c.h.b16 %v872
    %v1230 = vunpack.c.l.b16 %v873
    %v1231 = vunpack.c.h.b16 %v873
    %v1232 = vunpack.c.l.b16 %v874
    %v1233 = vunpack.c.h.b16 %v874
    %v1234 = vunpack.c.l.b16 %v875
    %v1235 = vunpack.c.h.b16 %v875
    %v1236 = vunpack.c.l.b16 %v876
    %v1237 = vunpack.c.h.b16 %v876
    %v1238 = vunpack.c.l.b16 %v877
    %v1239 = vunpack.c.h.b16 %v877
    %v1240 = vunpack.c.l.b16 %v878
    %v1241 = vunpack.c.h.b16 %v878
    %v1242 = vunpack.c.l.b16 %v879
    %v1243 = vunpack.c.h.b16 %v879
    %v1244 = vunpack.c.l.b16 %v880
    %v1245 = vunpack.c.h.b16 %v880
    %v1246 = vunpack.c.l.b16 %v881
    %v1247 = vunpack.c.h.b16 %v881
    %v1248 = vunpack.c.l.b16 %v882
    %v1249 = vunpack.c.h.b16 %v882
    %v1250 = vunpack.c.l.b16 %v883
    %v1251 = vunpack.c.h.b16 %v883
    %v1252 = vunpack.c.l.b16 %v884
    %v1253 = vunpack.c.h.b16 %v884
    %v1254 = vunpack.c.l.b16 %v885
    %v1255 = vunpack.c.h.b16 %v885
    %v1256 = vunpack.c.l.b16 %v886
    %v1257 = vunpack.c.h.b16 %v886
    %v1258 = vunpack.c.l.b16 %v887
    %v1259 = vunpack.c.h.b16 %v887
    %v1260 = vunpack.c.l.b16 %v888
    %v1261 = vunpack.c.h.b16 %v888
    %v1262 = vunpack.c.l.b16 %v889
    %v1263 = vunpack.c.h.b16 %v889
    %v1264 = vunpack.c.l.b16 %v890
    %v1265 = vunpack.c.h.b16 %v890
    %v1266 = vunpack.c.l.b16 %v891
    %v1267 = vunpack.c.h.b16 %v891
    %v1268 = vunpack.c.l.b16 %v892
    %v1269 = vunpack.c.h.b16 %v892
    %v1270 = vunpack.c.l.b16 %v893
    %v1271 = vunpack.c.h.b16 %v893
    %v1272 = vunpack.c.l.b16 %v894
    %v1273 = vunpack.c.h.b16 %v894
    %v1274 = vunpack.c.l.b16 %v895
    %v1275 = vunpack.c.h.b16 %v895
    %v1276 = vunpack.c.l.b16 %v896
    %v1277 = vunpack.c.h.b16 %v896
    %v1278 = vunpack.c.l.b16 %v897
    %v1279 = vunpack.c.h.b16 %v897
    %v1280 = vunpack.c.l.b16 %v898
    %v1281 = vunpack.c.h.b16 %v898
    %v1282 = vunpack.c.l.b16 %v899
    %v1283 = vunpack.c.h.b16 %v899
    %v1284 = vunpack.c.l.b16 %v900
    %v1285 = vunpack.c.h.b16 %v900
    %v1286 = vunpack.c.l.b16 %v901
    %v1287 = vunpack.c.h.b16 %v901
    %v1288 = vunpack.c.l.b16 %v902
    %v1289 = vunpack.c.h.b16 %v902
    %v1290 = vunpack.c.l.b16 %v903
    %v1291 = vunpack.c.h.b16 %v903
    %v1292 = vunpack.c.l.b16 %v904
    %v1293 = vunpack.c.h.b16 %v904
    %v1294 = vunpack.c.l.b16 %v905
    %v1295 = vunpack.c.h.b16 %v905
    %v1296 = vunpack.c.l.b16 %v906
    %v1297 = vunpack.c.h.b16 %v906
    %v1298 = vunpack.c.l.b16 %v907
    %v1299 = vunpack.c.h.b16 %v907
    %v1300 = vunpack.c.l.b16 %v908
    %v1301 = vunpack.c.h.b16 %v908
    %v1302 = vunpack.c.l.b16 %v909
    %v1303 = vunpack.c.h.b16 %v909
    %v1304 = vpack.c.b16 %v1052, %v1048
    %v1305 = vpack.c.b16 %v1053, %v1049
    %v1306 = vpack.c.b16 %v1054, %v1050
    %v1307 = vpack.c.b16 %v1055, %v1051
    %v1308 = vpack.c.b16 %v1060, %v1056
    %v1309 = vpack.c.b16 %v1061, %v1057
    %v1310 = vpack.c.b16 %v1062, %v1058
    %v1311 = vpack.c.b16 %v1063, %v1059
    %v1312 = vpack.c.b16 %v1068, %v1064
    %v1313 = vpack.c.b16 %v1069, %v1065
    %v1314 = vpack.c.b16 %v1070, %v1066
    %v1315 = vpack.c.b16 %v1071, %v1067
    %v1316 = vpack.c.b16 %v1076, %v1072
    %v1317 = vpack.c.b16 %v1077, %v1073
    %v1318 = vpack.c.b16 %v1078, %v1074
    %v1319 = vpack.c.b16 %v1079, %v1075
    %v1320 = vpack.c.b16 %v1084, %v1080
    %v1321 = vpack.c.b16 %v1085, %v1081
    %v1322 = vpack.c.b16 %v1086, %v1082
    %v1323 = vpack.c.b16 %v1087, %v1083
    %v1324 = vpack.c.b16 %v1092, %v1088
    %v1325 = vpack.c.b16 %v1093, %v1089
    %v1326 = vpack.c.b16 %v1094, %v1090
    %v1327 = vpack.c.b16 %v1095, %v1091
    %v1328 = vpack.c.b16 %v1100, %v1096
    %v1329 = vpack.c.b16 %v1101, %v1097
    %v1330 = vpack.c.b16 %v1102, %v1098
    %v1331 = vpack.c.b16 %v1103, %v1099
    %v1332 = vpack.c.b16 %v1108, %v1104
    %v1333 = vpack.c.b16 %v1109, %v1105
    %v1334 = vpack.c.b16 %v1110, %v1106
    %v1335 = vpack.c.b16 %v1111, %v1107
    %v1336 = vpack.c.b16 %v1116, %v1112
    %v1337 = vpack.c.b16 %v1117, %v1113
    %v1338 = vpack.c.b16 %v1118, %v1114
    %v1339 = vpack.c.b16 %v1119, %v1115
    %v1340 = vpack.c.b16 %v1124, %v1120
    %v1341 = vpack.c.b16 %v1125, %v1121
    %v1342 = vpack.c.b16 %v1126, %v1122
    %v1343 = vpack.c.b16 %v1127, %v1123
    %v1344 = vpack.c.b16 %v1132, %v1128
    %v1345 = vpack.c.b16 %v1133, %v1129
    %v1346 = vpack.c.b16 %v1134, %v1130
    %v1347 = vpack.c.b16 %v1135, %v1131
    %v1348 = vpack.c.b16 %v1140, %v1136
    %v1349 = vpack.c.b16 %v1141, %v1137
    %v1350 = vpack.c.b16 %v1142, %v1138
    %v1351 = vpack.c.b16 %v1143, %v1139
    %v1352 = vpack.c.b16 %v1148, %v1144
    %v1353 = vpack.c.b16 %v1149, %v1145
    %v1354 = vpack.c.b16 %v1150, %v1146
    %v1355 = vpack.c.b16 %v1151, %v1147
    %v1356 = vpack.c.b16 %v1156, %v1152
    %v1357 = vpack.c.b16 %v1157, %v1153
    %v1358 = vpack.c.b16 %v1158, %v1154
    %v1359 = vpack.c.b16 %v1159, %v1155
    %v1360 = vpack.c.b16 %v1164, %v1160
    %v1361 = vpack.c.b16 %v1165, %v1161
    %v1362 = vpack.c.b16 %v1166, %v1162
    %v1363 = vpack.c.b16 %v1167, %v1163
    %v1364 = vpack.c.b16 %v1172, %v1168
    %v1365 = vpack.c.b16 %v1173, %v1169
    %v1366 = vpack.c.b16 %v1174, %v1170
    %v1367 = vpack.c.b16 %v1175, %v1171
    %v1368 = vpack.c.b16 %v1180, %v1176
    %v1369 = vpack.c.b16 %v1181, %v1177
    %v1370 = vpack.c.b16 %v1182, %v1178
    %v1371 = vpack.c.b16 %v1183, %v1179
    %v1372 = vpack.c.b16 %v1188, %v1184
    %v1373 = vpack.c.b16 %v1189, %v1185
    %v1374 = vpack.c.b16 %v1190, %v1186
    %v1375 = vpack.c.b16 %v1191, %v1187
    %v1376 = vpack.c.b16 %v1196, %v1192
    %v1377 = vpack.c.b16 %v1197, %v1193
    %v1378 = vpack.c.b16 %v1198, %v1194
    %v1379 = vpack.c.b16 %v1199, %v1195
    %v1380 = vpack.c.b16 %v1204, %v1200
    %v1381 = vpack.c.b16 %v1205, %v1201
    %v1382 = vpack.c.b16 %v1206, %v1202
    %v1383 = vpack.c.b16 %v1207, %v1203
    %v1384 = vpack.c.b16 %v1212, %v1208
    %v1385 = vpack.c.b16 %v1213, %v1209
    %v1386 = vpack.c.b16 %v1214, %v1210
    %v1387 = vpack.c.b16 %v1215, %v1211
    %v1388 = vpack.c.b16 %v1220, %v1216
    %v1389 = vpack.c.b16 %v1221, %v1217
    %v1390 = vpack.c.b16 %v1222, %v1218
    %v1391 = vpack.c.b16 %v1223, %v1219
    %v1392 = vpack.c.b16 %v1228, %v1224
    %v1393 = vpack.c.b16 %v1229, %v1225
    %v1394 = vpack.c.b16 %v1230, %v1226
    %v1395 = vpack.c.b16 %v1231, %v1227
    %v1396 = vpack.c.b16 %v1236, %v1232
    %v1397 = vpack.c.b16 %v1237, %v1233
    %v1398 = vpack.c.b16 %v1238, %v1234
    %v1399 = vpack.c.b16 %v1239, %v1235
    %v1400 = vpack.c.b16 %v1244, %v1240
    %v1401 = vpack.c.b16 %v1245, %v1241
    %v1402 = vpack.c.b16 %v1246, %v1242
    %v1403 = vpack.c.b16 %v1247, %v1243
    %v1404 = vpack.c.b16 %v1252, %v1248
    %v1405 = vpack.c.b16 %v1253, %v1249
    %v1406 = vpack.c.b16 %v1254, %v1250
    %v1407 = vpack.c.b16 %v1255, %v1251
    %v1408 = vpack.c.b16 %v1260, %v1256
    %v1409 = vpack.c.b16 %v1261, %v1257
    %v1410 = vpack.c.b16 %v1262, %v1258
    %v1411 = vpack.c.b16 %v1263, %v1259
    %v1412 = vpack.c.b16 %v1268, %v1264
    %v1413 = vpack.c.b16 %v1269, %v1265
    %v1414 = vpack.c.b16 %v1270, %v1266
    %v1415 = vpack.c.b16 %v1271, %v1267
    %v1416 = vpack.c.b16 %v1276, %v1272
    %v1417 = vpack.c.b16 %v1277, %v1273
    %v1418 = vpack.c.b16 %v1278, %v1274
    %v1419 = vpack.c.b16 %v1279, %v1275
    %v1420 = vpack.c.b16 %v1284, %v1280
    %v1421 = vpack.c.b16 %v1285, %v1281
    %v1422 = vpack.c.b16 %v1286, %v1282
    %v1423 = vpack.c.b16 %v1287, %v1283
    %v1424 = vpack.c.b16 %v1292, %v1288
    %v1425 = vpack.c.b16 %v1293, %v1289
    %v1426 = vpack.c.b16 %v1294, %v1290
    %v1427 = vpack.c.b16 %v1295, %v1291
    %v1428 = vpack.c.b16 %v1300, %v1296
    %v1429 = vpack.c.b16 %v1301, %v1297
    %v1430 = vpack.c.b16 %v1302, %v1298
    %v1431 = vpack.c.b16 %v1303, %v1299
    %1560 = vmatpush.bf16.msra.mxu0 %v1332
    %1561 = vmatpush.bf16.msra.mxu0 %v1328
    %1562 = vmatpush.bf16.msra.mxu0 %v1324
    %1563 = vmatpush.bf16.msra.mxu0 %v1320
    %1564 = vmatpush.bf16.msra.mxu0 %v1316
    %1565 = vmatpush.bf16.msra.mxu0 %v1312
    %1566 = vmatpush.bf16.msra.mxu0 %v1308
    %1567 = vmatpush.bf16.msra.mxu0 %v1304
    %1568 = vmatmul.bf16.gmra.mxu0 %v778
    %v1569 = vpop.f32.mrf.mxu0
    %v1570 = vadd.f32 %v912, %v1569
    %v1571 = vpop.f32.mrf.mxu0
    %v1572 = vadd.f32 %v912, %v1571
    %1573 = vdwg.mxu0
    %1574 = vmatpush.bf16.msra.mxu0 %v1364
    %1575 = vmatpush.bf16.msra.mxu0 %v1360
    %1576 = vmatpush.bf16.msra.mxu0 %v1356
    %1577 = vmatpush.bf16.msra.mxu0 %v1352
    %1578 = vmatpush.bf16.msra.mxu0 %v1348
    %1579 = vmatpush.bf16.msra.mxu0 %v1344
    %1580 = vmatpush.bf16.msra.mxu0 %v1340
    %1581 = vmatpush.bf16.msra.mxu0 %v1336
    %1582 = vmatmul.bf16.gmra.mxu0 %v779
    %v1583 = vpop.f32.mrf.mxu0
    %v1584 = vadd.f32 %v1570, %v1583
    %v1585 = vpop.f32.mrf.mxu0
    %v1586 = vadd.f32 %v1572, %v1585
    %1587 = vdwg.mxu0
    %1588 = vmatpush.bf16.msra.mxu0 %v1396
    %1589 = vmatpush.bf16.msra.mxu0 %v1392
    %1590 = vmatpush.bf16.msra.mxu0 %v1388
    %1591 = vmatpush.bf16.msra.mxu0 %v1384
    %1592 = vmatpush.bf16.msra.mxu0 %v1380
    %1593 = vmatpush.bf16.msra.mxu0 %v1376
    %1594 = vmatpush.bf16.msra.mxu0 %v1372
    %1595 = vmatpush.bf16.msra.mxu0 %v1368
    %1596 = vmatmul.bf16.gmra.mxu0 %v780
    %v1597 = vpop.f32.mrf.mxu0
    %v1598 = vadd.f32 %v1584, %v1597
    %v1599 = vpop.f32.mrf.mxu0
    %v1600 = vadd.f32 %v1586, %v1599
    %1601 = vdwg.mxu0
    %1602 = vmatpush.bf16.msra.mxu0 %v1428
    %1603 = vmatpush.bf16.msra.mxu0 %v1424
    %1604 = vmatpush.bf16.msra.mxu0 %v1420
    %1605 = vmatpush.bf16.msra.mxu0 %v1416
    %1606 = vmatpush.bf16.msra.mxu0 %v1412
    %1607 = vmatpush.bf16.msra.mxu0 %v1408
    %1608 = vmatpush.bf16.msra.mxu0 %v1404
    %1609 = vmatpush.bf16.msra.mxu0 %v1400
    %1610 = vmatmul.bf16.gmra.mxu0 %v781
    %v1611 = vpop.f32.mrf.mxu0
    %v1612 = vadd.f32 %v1598, %v1611
    %v1613 = vpop.f32.mrf.mxu0
    %v1614 = vadd.f32 %v1600, %v1613
    %1615 = vdwg.mxu0
    %1616 = vmatpush.bf16.msra.mxu0 %v1333
    %1617 = vmatpush.bf16.msra.mxu0 %v1329
    %1618 = vmatpush.bf16.msra.mxu0 %v1325
    %1619 = vmatpush.bf16.msra.mxu0 %v1321
    %1620 = vmatpush.bf16.msra.mxu0 %v1317
    %1621 = vmatpush.bf16.msra.mxu0 %v1313
    %1622 = vmatpush.bf16.msra.mxu0 %v1309
    %1623 = vmatpush.bf16.msra.mxu0 %v1305
    %1624 = vmatmul.bf16.gmra.mxu0 %v778
    %v1625 = vpop.f32.mrf.mxu0
    %v1626 = vadd.f32 %v913, %v1625
    %v1627 = vpop.f32.mrf.mxu0
    %v1628 = vadd.f32 %v913, %v1627
    %1629 = vdwg.mxu0
    %1630 = vmatpush.bf16.msra.mxu0 %v1365
    %1631 = vmatpush.bf16.msra.mxu0 %v1361
    %1632 = vmatpush.bf16.msra.mxu0 %v1357
    %1633 = vmatpush.bf16.msra.mxu0 %v1353
    %1634 = vmatpush.bf16.msra.mxu0 %v1349
    %1635 = vmatpush.bf16.msra.mxu0 %v1345
    %1636 = vmatpush.bf16.msra.mxu0 %v1341
    %1637 = vmatpush.bf16.msra.mxu0 %v1337
    %1638 = vmatmul.bf16.gmra.mxu0 %v779
    %v1639 = vpop.f32.mrf.mxu0
    %v1640 = vadd.f32 %v1626, %v1639
    %v1641 = vpop.f32.mrf.mxu0
    %v1642 = vadd.f32 %v1628, %v1641
    %1643 = vdwg.mxu0
    %1644 = vmatpush.bf16.msra.mxu0 %v1397
    %1645 = vmatpush.bf16.msra.mxu0 %v1393
    %1646 = vmatpush.bf16.msra.mxu0 %v1389
    %1647 = vmatpush.bf16.msra.mxu0 %v1385
    %1648 = vmatpush.bf16.msra.mxu0 %v1381
    %1649 = vmatpush.bf16.msra.mxu0 %v1377
    %1650 = vmatpush.bf16.msra.mxu0 %v1373
    %1651 = vmatpush.bf16.msra.mxu0 %v1369
    %1652 = vmatmul.bf16.gmra.mxu0 %v780
    %v1653 = vpop.f32.mrf.mxu0
    %v1654 = vadd.f32 %v1640, %v1653
    %v1655 = vpop.f32.mrf.mxu0
    %v1656 = vadd.f32 %v1642, %v1655
    %1657 = vdwg.mxu0
    %1658 = vmatpush.bf16.msra.mxu0 %v1429
    %1659 = vmatpush.bf16.msra.mxu0 %v1425
    %1660 = vmatpush.bf16.msra.mxu0 %v1421
    %1661 = vmatpush.bf16.msra.mxu0 %v1417
    %1662 = vmatpush.bf16.msra.mxu0 %v1413
    %1663 = vmatpush.bf16.msra.mxu0 %v1409
    %1664 = vmatpush.bf16.msra.mxu0 %v1405
    %1665 = vmatpush.bf16.msra.mxu0 %v1401
    %1666 = vmatmul.bf16.gmra.mxu0 %v781
    %v1667 = vpop.f32.mrf.mxu0
    %v1668 = vadd.f32 %v1654, %v1667
    %v1669 = vpop.f32.mrf.mxu0
    %v1670 = vadd.f32 %v1656, %v1669
    %1671 = vdwg.mxu0
    %1672 = vmatpush.bf16.msra.mxu0 %v1334
    %1673 = vmatpush.bf16.msra.mxu0 %v1330
    %1674 = vmatpush.bf16.msra.mxu0 %v1326
    %1675 = vmatpush.bf16.msra.mxu0 %v1322
    %1676 = vmatpush.bf16.msra.mxu0 %v1318
    %1677 = vmatpush.bf16.msra.mxu0 %v1314
    %1678 = vmatpush.bf16.msra.mxu0 %v1310
    %1679 = vmatpush.bf16.msra.mxu0 %v1306
    %1680 = vmatmul.bf16.gmra.mxu0 %v778
    %v1681 = vpop.f32.mrf.mxu0
    %v1682 = vadd.f32 %v914, %v1681
    %v1683 = vpop.f32.mrf.mxu0
    %v1684 = vadd.f32 %v914, %v1683
    %1685 = vdwg.mxu0
    %1686 = vmatpush.bf16.msra.mxu0 %v1366
    %1687 = vmatpush.bf16.msra.mxu0 %v1362
    %1688 = vmatpush.bf16.msra.mxu0 %v1358
    %1689 = vmatpush.bf16.msra.mxu0 %v1354
    %1690 = vmatpush.bf16.msra.mxu0 %v1350
    %1691 = vmatpush.bf16.msra.mxu0 %v1346
    %1692 = vmatpush.bf16.msra.mxu0 %v1342
    %1693 = vmatpush.bf16.msra.mxu0 %v1338
    %1694 = vmatmul.bf16.gmra.mxu0 %v779
    %v1695 = vpop.f32.mrf.mxu0
    %v1696 = vadd.f32 %v1682, %v1695
    %v1697 = vpop.f32.mrf.mxu0
    %v1698 = vadd.f32 %v1684, %v1697
    %1699 = vdwg.mxu0
    %1700 = vmatpush.bf16.msra.mxu0 %v1398
    %1701 = vmatpush.bf16.msra.mxu0 %v1394
    %1702 = vmatpush.bf16.msra.mxu0 %v1390
    %1703 = vmatpush.bf16.msra.mxu0 %v1386
    %1704 = vmatpush.bf16.msra.mxu0 %v1382
    %1705 = vmatpush.bf16.msra.mxu0 %v1378
    %1706 = vmatpush.bf16.msra.mxu0 %v1374
    %1707 = vmatpush.bf16.msra.mxu0 %v1370
    %1708 = vmatmul.bf16.gmra.mxu0 %v780
    %v1709 = vpop.f32.mrf.mxu0
    %v1710 = vadd.f32 %v1696, %v1709
    %v1711 = vpop.f32.mrf.mxu0
    %v1712 = vadd.f32 %v1698, %v1711
    %1713 = vdwg.mxu0
    %1714 = vmatpush.bf16.msra.mxu0 %v1430
    %1715 = vmatpush.bf16.msra.mxu0 %v1426
    %1716 = vmatpush.bf16.msra.mxu0 %v1422
    %1717 = vmatpush.bf16.msra.mxu0 %v1418
    %1718 = vmatpush.bf16.msra.mxu0 %v1414
    %1719 = vmatpush.bf16.msra.mxu0 %v1410
    %1720 = vmatpush.bf16.msra.mxu0 %v1406
    %1721 = vmatpush.bf16.msra.mxu0 %v1402
    %1722 = vmatmul.bf16.gmra.mxu0 %v781
    %v1723 = vpop.f32.mrf.mxu0
    %v1724 = vadd.f32 %v1710, %v1723
    %v1725 = vpop.f32.mrf.mxu0
    %v1726 = vadd.f32 %v1712, %v1725
    %1727 = vdwg.mxu0
    %1728 = vmatpush.bf16.msra.mxu0 %v1335
    %1729 = vmatpush.bf16.msra.mxu0 %v1331
    %1730 = vmatpush.bf16.msra.mxu0 %v1327
    %1731 = vmatpush.bf16.msra.mxu0 %v1323
    %1732 = vmatpush.bf16.msra.mxu0 %v1319
    %1733 = vmatpush.bf16.msra.mxu0 %v1315
    %1734 = vmatpush.bf16.msra.mxu0 %v1311
    %1735 = vmatpush.bf16.msra.mxu0 %v1307
    %1736 = vmatmul.bf16.gmra.mxu0 %v778
    %v1737 = vpop.f32.mrf.mxu0
    %v1738 = vadd.f32 %v915, %v1737
    %v1739 = vpop.f32.mrf.mxu0
    %v1740 = vadd.f32 %v915, %v1739
    %1741 = vdwg.mxu0
    %1742 = vmatpush.bf16.msra.mxu0 %v1367
    %1743 = vmatpush.bf16.msra.mxu0 %v1363
    %1744 = vmatpush.bf16.msra.mxu0 %v1359
    %1745 = vmatpush.bf16.msra.mxu0 %v1355
    %1746 = vmatpush.bf16.msra.mxu0 %v1351
    %1747 = vmatpush.bf16.msra.mxu0 %v1347
    %1748 = vmatpush.bf16.msra.mxu0 %v1343
    %1749 = vmatpush.bf16.msra.mxu0 %v1339
    %1750 = vmatmul.bf16.gmra.mxu0 %v779
    %v1751 = vpop.f32.mrf.mxu0
    %v1752 = vadd.f32 %v1738, %v1751
    %v1753 = vpop.f32.mrf.mxu0
    %v1754 = vadd.f32 %v1740, %v1753
    %1755 = vdwg.mxu0
    %1756 = vmatpush.bf16.msra.mxu0 %v1399
    %1757 = vmatpush.bf16.msra.mxu0 %v1395
    %1758 = vmatpush.bf16.msra.mxu0 %v1391
    %1759 = vmatpush.bf16.msra.mxu0 %v1387
    %1760 = vmatpush.bf16.msra.mxu0 %v1383
    %1761 = vmatpush.bf16.msra.mxu0 %v1379
    %1762 = vmatpush.bf16.msra.mxu0 %v1375
    %1763 = vmatpush.bf16.msra.mxu0 %v1371
    %1764 = vmatmul.bf16.gmra.mxu0 %v780
    %v1765 = vpop.f32.mrf.mxu0
    %v1766 = vadd.f32 %v1752, %v1765
    %v1767 = vpop.f32.mrf.mxu0
    %v1768 = vadd.f32 %v1754, %v1767
    %1769 = vdwg.mxu0
    %1770 = vmatpush.bf16.msra.mxu0 %v1431
    %1771 = vmatpush.bf16.msra.mxu0 %v1427
    %1772 = vmatpush.bf16.msra.mxu0 %v1423
    %1773 = vmatpush.bf16.msra.mxu0 %v1419
    %1774 = vmatpush.bf16.msra.mxu0 %v1415
    %1775 = vmatpush.bf16.msra.mxu0 %v1411
    %1776 = vmatpush.bf16.msra.mxu0 %v1407
    %1777 = vmatpush.bf16.msra.mxu0 %v1403
    %1778 = vmatmul.bf16.gmra.mxu0 %v781
    %v1779 = vpop.f32.mrf.mxu0
    %v1780 = vadd.f32 %v1766, %v1779
    %v1781 = vpop.f32.mrf.mxu0
    %v1782 = vadd.f32 %v1768, %v1781
    %1783 = vdwg.mxu0
    %v1784 = vmax.f32 %v1612, 0.0
    %v1785 = vmax.f32 %v1668, 0.0
    %v1786 = vmax.f32 %v1724, 0.0
    %v1787 = vmax.f32 %v1780, 0.0
    %v1788 = vmax.f32 %v1614, 0.0
    %v1789 = vmax.f32 %v1670, 0.0
    %v1790 = vmax.f32 %v1726, 0.0
    %v1791 = vmax.f32 %v1782, 0.0
    %v1792 = vpack.c.bf16 %v1788, %v1784
    %v1793 = vpack.c.bf16 %v1789, %v1785
    %v1794 = vpack.c.bf16 %v1790, %v1786
    %v1795 = vpack.c.bf16 %v1791, %v1787
    %v1796 = vld [vmem:[%s9] sm:$0xf]
    %v1797 = vld [vmem:[%s9 + $0x4] sm:$0xf]
    %v1798 = vld [vmem:[%s9 + $0x8] sm:$0xf]
    %v1799 = vld [vmem:[%s9 + $0xc] sm:$0xf]
    %v1800 = vld [vmem:[%s9 + $0x10] sm:$0xf]
    %v1801 = vld [vmem:[%s9 + $0x14] sm:$0xf]
    %v1802 = vld [vmem:[%s9 + $0x18] sm:$0xf]
    %v1803 = vld [vmem:[%s9 + $0x1c] sm:$0xf]
    %v1804 = vld [vmem:[%s9 + $0x20] sm:$0xf]
    %v1805 = vld [vmem:[%s9 + $0x24] sm:$0xf]
    %v1806 = vld [vmem:[%s9 + $0x28] sm:$0xf]
    %v1807 = vld [vmem:[%s9 + $0x2c] sm:$0xf]
    %v1808 = vld [vmem:[%s9 + $0x30] sm:$0xf]
    %v1809 = vld [vmem:[%s9 + $0x34] sm:$0xf]
    %v1810 = vld [vmem:[%s9 + $0x38] sm:$0xf]
    %v1811 = vld [vmem:[%s9 + $0x3c] sm:$0xf]
    %v1812 = vld [vmem:[%s9 + $0x40] sm:$0xf]
    %v1813 = vld [vmem:[%s9 + $0x44] sm:$0xf]
    %v1814 = vld [vmem:[%s9 + $0x48] sm:$0xf]
    %v1815 = vld [vmem:[%s9 + $0x4c] sm:$0xf]
    %v1816 = vld [vmem:[%s9 + $0x50] sm:$0xf]
    %v1817 = vld [vmem:[%s9 + $0x54] sm:$0xf]
    %v1818 = vld [vmem:[%s9 + $0x58] sm:$0xf]
    %v1819 = vld [vmem:[%s9 + $0x5c] sm:$0xf]
    %v1820 = vld [vmem:[%s9 + $0x60] sm:$0xf]
    %v1821 = vld [vmem:[%s9 + $0x64] sm:$0xf]
    %v1822 = vld [vmem:[%s9 + $0x68] sm:$0xf]
    %v1823 = vld [vmem:[%s9 + $0x6c] sm:$0xf]
    %v1824 = vld [vmem:[%s9 + $0x70] sm:$0xf]
    %v1825 = vld [vmem:[%s9 + $0x74] sm:$0xf]
    %v1826 = vld [vmem:[%s9 + $0x78] sm:$0xf]
    %v1827 = vld [vmem:[%s9 + $0x7c] sm:$0xf]
    %v1828 = vld [vmem:[%s9 + $0x80] sm:$0xf]
    %v1829 = vld [vmem:[%s9 + $0x84] sm:$0xf]
    %v1830 = vld [vmem:[%s9 + $0x88] sm:$0xf]
    %v1831 = vld [vmem:[%s9 + $0x8c] sm:$0xf]
    %v1832 = vld [vmem:[%s9 + $0x90] sm:$0xf]
    %v1833 = vld [vmem:[%s9 + $0x94] sm:$0xf]
    %v1834 = vld [vmem:[%s9 + $0x98] sm:$0xf]
    %v1835 = vld [vmem:[%s9 + $0x9c] sm:$0xf]
    %v1836 = vld [vmem:[%s9 + $0xa0] sm:$0xf]
    %v1837 = vld [vmem:[%s9 + $0xa4] sm:$0xf]
    %v1838 = vld [vmem:[%s9 + $0xa8] sm:$0xf]
    %v1839 = vld [vmem:[%s9 + $0xac] sm:$0xf]
    %v1840 = vld [vmem:[%s9 + $0xb0] sm:$0xf]
    %v1841 = vld [vmem:[%s9 + $0xb4] sm:$0xf]
    %v1842 = vld [vmem:[%s9 + $0xb8] sm:$0xf]
    %v1843 = vld [vmem:[%s9 + $0xbc] sm:$0xf]
    %v1844 = vld [vmem:[%s9 + $0xc0] sm:$0xf]
    %v1845 = vld [vmem:[%s9 + $0xc4] sm:$0xf]
    %v1846 = vld [vmem:[%s9 + $0xc8] sm:$0xf]
    %v1847 = vld [vmem:[%s9 + $0xcc] sm:$0xf]
    %v1848 = vld [vmem:[%s9 + $0xd0] sm:$0xf]
    %v1849 = vld [vmem:[%s9 + $0xd4] sm:$0xf]
    %v1850 = vld [vmem:[%s9 + $0xd8] sm:$0xf]
    %v1851 = vld [vmem:[%s9 + $0xdc] sm:$0xf]
    %v1852 = vld [vmem:[%s9 + $0xe0] sm:$0xf]
    %v1853 = vld [vmem:[%s9 + $0xe4] sm:$0xf]
    %v1854 = vld [vmem:[%s9 + $0xe8] sm:$0xf]
    %v1855 = vld [vmem:[%s9 + $0xec] sm:$0xf]
    %v1856 = vld [vmem:[%s9 + $0xf0] sm:$0xf]
    %v1857 = vld [vmem:[%s9 + $0xf4] sm:$0xf]
    %v1858 = vld [vmem:[%s9 + $0xf8] sm:$0xf]
    %v1859 = vld [vmem:[%s9 + $0xfc] sm:$0xf]
    %v1860 = vld [vmem:[%s10] sm:$0x1]
    %v1862 = vperm.slane %v1860, 0
    %v1928 = vunpack.c.l.b16 %v1796
    %v1929 = vunpack.c.l.b16 %v1797
    %v1930 = vunpack.c.l.b16 %v1798
    %v1931 = vunpack.c.l.b16 %v1799
    %v1932 = vunpack.c.l.b16 %v1800
    %v1933 = vunpack.c.l.b16 %v1801
    %v1934 = vunpack.c.l.b16 %v1802
    %v1935 = vunpack.c.l.b16 %v1803
    %v1936 = vunpack.c.l.b16 %v1804
    %v1937 = vunpack.c.l.b16 %v1805
    %v1938 = vunpack.c.l.b16 %v1806
    %v1939 = vunpack.c.l.b16 %v1807
    %v1940 = vunpack.c.l.b16 %v1808
    %v1941 = vunpack.c.l.b16 %v1809
    %v1942 = vunpack.c.l.b16 %v1810
    %v1943 = vunpack.c.l.b16 %v1811
    %v1944 = vunpack.c.l.b16 %v1812
    %v1945 = vunpack.c.l.b16 %v1813
    %v1946 = vunpack.c.l.b16 %v1814
    %v1947 = vunpack.c.l.b16 %v1815
    %v1948 = vunpack.c.l.b16 %v1816
    %v1949 = vunpack.c.l.b16 %v1817
    %v1950 = vunpack.c.l.b16 %v1818
    %v1951 = vunpack.c.l.b16 %v1819
    %v1952 = vunpack.c.l.b16 %v1820
    %v1953 = vunpack.c.l.b16 %v1821
    %v1954 = vunpack.c.l.b16 %v1822
    %v1955 = vunpack.c.l.b16 %v1823
    %v1956 = vunpack.c.l.b16 %v1824
    %v1957 = vunpack.c.l.b16 %v1825
    %v1958 = vunpack.c.l.b16 %v1826
    %v1959 = vunpack.c.l.b16 %v1827
    %v1960 = vunpack.c.l.b16 %v1828
    %v1961 = vunpack.c.l.b16 %v1829
    %v1962 = vunpack.c.l.b16 %v1830
    %v1963 = vunpack.c.l.b16 %v1831
    %v1964 = vunpack.c.l.b16 %v1832
    %v1965 = vunpack.c.l.b16 %v1833
    %v1966 = vunpack.c.l.b16 %v1834
    %v1967 = vunpack.c.l.b16 %v1835
    %v1968 = vunpack.c.l.b16 %v1836
    %v1969 = vunpack.c.l.b16 %v1837
    %v1970 = vunpack.c.l.b16 %v1838
    %v1971 = vunpack.c.l.b16 %v1839
    %v1972 = vunpack.c.l.b16 %v1840
    %v1973 = vunpack.c.l.b16 %v1841
    %v1974 = vunpack.c.l.b16 %v1842
    %v1975 = vunpack.c.l.b16 %v1843
    %v1976 = vunpack.c.l.b16 %v1844
    %v1977 = vunpack.c.l.b16 %v1845
    %v1978 = vunpack.c.l.b16 %v1846
    %v1979 = vunpack.c.l.b16 %v1847
    %v1980 = vunpack.c.l.b16 %v1848
    %v1981 = vunpack.c.l.b16 %v1849
    %v1982 = vunpack.c.l.b16 %v1850
    %v1983 = vunpack.c.l.b16 %v1851
    %v1984 = vunpack.c.l.b16 %v1852
    %v1985 = vunpack.c.l.b16 %v1853
    %v1986 = vunpack.c.l.b16 %v1854
    %v1987 = vunpack.c.l.b16 %v1855
    %v1988 = vunpack.c.l.b16 %v1856
    %v1989 = vunpack.c.l.b16 %v1857
    %v1990 = vunpack.c.l.b16 %v1858
    %v1991 = vunpack.c.l.b16 %v1859
    %v1992 = vpack.c.b16 %v1929, %v1928
    %v1993 = vpack.c.b16 %v1931, %v1930
    %v1994 = vpack.c.b16 %v1933, %v1932
    %v1995 = vpack.c.b16 %v1935, %v1934
    %v1996 = vpack.c.b16 %v1937, %v1936
    %v1997 = vpack.c.b16 %v1939, %v1938
    %v1998 = vpack.c.b16 %v1941, %v1940
    %v1999 = vpack.c.b16 %v1943, %v1942
    %v2000 = vpack.c.b16 %v1945, %v1944
    %v2001 = vpack.c.b16 %v1947, %v1946
    %v2002 = vpack.c.b16 %v1949, %v1948
    %v2003 = vpack.c.b16 %v1951, %v1950
    %v2004 = vpack.c.b16 %v1953, %v1952
    %v2005 = vpack.c.b16 %v1955, %v1954
    %v2006 = vpack.c.b16 %v1957, %v1956
    %v2007 = vpack.c.b16 %v1959, %v1958
    %v2008 = vpack.c.b16 %v1961, %v1960
    %v2009 = vpack.c.b16 %v1963, %v1962
    %v2010 = vpack.c.b16 %v1965, %v1964
    %v2011 = vpack.c.b16 %v1967, %v1966
    %v2012 = vpack.c.b16 %v1969, %v1968
    %v2013 = vpack.c.b16 %v1971, %v1970
    %v2014 = vpack.c.b16 %v1973, %v1972
    %v2015 = vpack.c.b16 %v1975, %v1974
    %v2016 = vpack.c.b16 %v1977, %v1976
    %v2017 = vpack.c.b16 %v1979, %v1978
    %v2018 = vpack.c.b16 %v1981, %v1980
    %v2019 = vpack.c.b16 %v1983, %v1982
    %v2020 = vpack.c.b16 %v1985, %v1984
    %v2021 = vpack.c.b16 %v1987, %v1986
    %v2022 = vpack.c.b16 %v1989, %v1988
    %v2023 = vpack.c.b16 %v1991, %v1990
    %2056 = vmatpush.bf16.msra.mxu0 %v1999
    %2057 = vmatpush.bf16.msra.mxu0 %v1998
    %2058 = vmatpush.bf16.msra.mxu0 %v1997
    %2059 = vmatpush.bf16.msra.mxu0 %v1996
    %2060 = vmatpush.bf16.msra.mxu0 %v1995
    %2061 = vmatpush.bf16.msra.mxu0 %v1994
    %2062 = vmatpush.bf16.msra.mxu0 %v1993
    %2063 = vmatpush.bf16.msra.mxu0 %v1992
    %2064 = vmatmul.bf16.gmra.mxu0 %v1792
    %v2065 = vpop.f32.mrf.mxu0
    %v2066 = vadd.f32 %v1862, %v2065
    %v2067 = vpop.f32.mrf.mxu0
    %v2068 = vadd.f32 %v1862, %v2067
    %2069 = vdwg.mxu0
    %2070 = vmatpush.bf16.msra.mxu0 %v2007
    %2071 = vmatpush.bf16.msra.mxu0 %v2006
    %2072 = vmatpush.bf16.msra.mxu0 %v2005
    %2073 = vmatpush.bf16.msra.mxu0 %v2004
    %2074 = vmatpush.bf16.msra.mxu0 %v2003
    %2075 = vmatpush.bf16.msra.mxu0 %v2002
    %2076 = vmatpush.bf16.msra.mxu0 %v2001
    %2077 = vmatpush.bf16.msra.mxu0 %v2000
    %2078 = vmatmul.bf16.gmra.mxu0 %v1793
    %v2079 = vpop.f32.mrf.mxu0
    %v2080 = vadd.f32 %v2066, %v2079
    %v2081 = vpop.f32.mrf.mxu0
    %v2082 = vadd.f32 %v2068, %v2081
    %2083 = vdwg.mxu0
    %2084 = vmatpush.bf16.msra.mxu0 %v2015
    %2085 = vmatpush.bf16.msra.mxu0 %v2014
    %2086 = vmatpush.bf16.msra.mxu0 %v2013
    %2087 = vmatpush.bf16.msra.mxu0 %v2012
    %2088 = vmatpush.bf16.msra.mxu0 %v2011
    %2089 = vmatpush.bf16.msra.mxu0 %v2010
    %2090 = vmatpush.bf16.msra.mxu0 %v2009
    %2091 = vmatpush.bf16.msra.mxu0 %v2008
    %2092 = vmatmul.bf16.gmra.mxu0 %v1794
    %v2093 = vpop.f32.mrf.mxu0
    %v2094 = vadd.f32 %v2080, %v2093
    %v2095 = vpop.f32.mrf.mxu0
    %v2096 = vadd.f32 %v2082, %v2095
    %2097 = vdwg.mxu0
    %2098 = vmatpush.bf16.msra.mxu0 %v2023
    %2099 = vmatpush.bf16.msra.mxu0 %v2022
    %2100 = vmatpush.bf16.msra.mxu0 %v2021
    %2101 = vmatpush.bf16.msra.mxu0 %v2020
    %2102 = vmatpush.bf16.msra.mxu0 %v2019
    %2103 = vmatpush.bf16.msra.mxu0 %v2018
    %2104 = vmatpush.bf16.msra.mxu0 %v2017
    %2105 = vmatpush.bf16.msra.mxu0 %v2016
    %2106 = vmatmul.bf16.gmra.mxu0 %v1795
    %v2107 = vpop.f32.mrf.mxu0
    %v2108 = vadd.f32 %v2094, %v2107
    %v2109 = vpop.f32.mrf.mxu0
    %v2110 = vadd.f32 %v2096, %v2109
    %2111 = vdwg.mxu0
    %v2112 = vtanh.pop %v2108
    %v2113 = vtanh.pop %v2110
    %2114 = vst [vmem:[%s11] sm:$0xff] %v2112
    %2115 = vst [vmem:[%s11 + $0x8] sm:$0xff] %v2113
    // Predicated region
    $region54: #{generator_forward.1} parent=1 // pred_check
      _
    $region55: #{generator_forward.1} parent=1 // pred_check_branch
      %2117 = sbr.rel (0) target = $region57
    $region56: #{generator_forward.1} parent=1 // pred_region
      _
    $region57: #{generator_forward.1} parent=1 // pred_fallthru
      _
    // Predicated region
    $region58: #{generator_forward.1} parent=1 // pred_check
      _
    $region59: #{generator_forward.1} parent=1 // pred_check_branch
      %2119 = sbr.rel (0) target = $region61
    $region60: #{generator_forward.1} parent=1 // pred_region
      _
    $region61: #{generator_forward.1} parent=1 // pred_fallthru
      _
    %2120 = vsyncpa [#allocation3], 1
    %2121 = vsyncpa [#allocation5], 1

</llo_original>
